<compile_context>
chip_gen: v7x
topology: tpu7x:2x2x1
jax: 0.10.0
libtpu: 0.0.40
codegen_flags: <defaults>
</compile_context>

<pallas_src>
import functools

import jax
import jax.numpy as jnp
from jax.experimental import pallas as pl
from jax.experimental.pallas import tpu as pltpu

_LANES = 128
_CHUNK_ROWS = 8            # one int32 vreg per (8, 128) sub-chunk
_MAX_TILE_ROWS = 256       # DMA tile height (rows of 128 lanes)
_UNROLL_THRESHOLD = 64     # fully unroll the face loop below this
_GATHER_MIN_FACES = 512    # switch to the VMEM table-gather path above this


def _round_up(x, m):
    return ((x + m - 1) // m) * m


def _kernel_body(code_ref, pairs_ref, idx_ref, out_ref, *,
                 num_faces, num_pairs, use_gather):
    """idx_ref / out_ref: (2, tile_rows, 128) int32 blocks.

    code_ref: packed (segm | parent << 16) table -- SMEM (F,) scalars for the
    select-loop path, VMEM (1, F_pad) for the gather path.
    pairs_ref: (max(P,1),) SMEM, canonically packed min | max << 16 pairs.
    """
    tile_rows = idx_ref.shape[1]
    num_chunks = tile_rows // _CHUNK_ROWS

    def chunk(off):
        idx0 = idx_ref[0, pl.ds(off, _CHUNK_ROWS), :]
        idx1 = idx_ref[1, pl.ds(off, _CHUNK_ROWS), :]
        # PyTorch long-tensor indexing wraps negative indices (-1 -> F-1).
        w0 = jnp.where(idx0 < 0, idx0 + num_faces, idx0)
        w1 = jnp.where(idx1 < 0, idx1 + num_faces, idx1)

        if use_gather:
            # TODO(synk): validate the large-F gather lowering per TPU
            # generation; a chunked in-vreg dynamic_gather may be preferable
            # for very large tables.
            codes = code_ref[0, :]
            code0 = jnp.take(codes, w0, axis=0)
            code1 = jnp.take(codes, w1, axis=0)
        else:
            zero = jnp.zeros_like(w0)

            def step(f, c0, c1):
                val = code_ref[f]                       # scalar SMEM read
                c0 = jnp.where(w0 == f, val, c0)
                c1 = jnp.where(w1 == f, val, c1)
                return c0, c1

            if num_faces <= _UNROLL_THRESHOLD:
                code0, code1 = zero, zero
                for f in range(num_faces):              # compact static unroll
                    code0, code1 = step(f, code0, code1)
            else:
                code0, code1 = jax.lax.fori_loop(
                    0, num_faces, lambda f, cc: step(f, *cc), (zero, zero),
                    unroll=8)

        recv_segm = code0 & 0xFFFF
        intr_segm = code1 & 0xFFFF
        recv_par = code0 >> 16        # arithmetic shift: -1 parent survives
        intr_par = code1 >> 16

        # Re-read idx0 for the validity gate instead of keeping it live
        # across the VALU-bound face loop (vld slots are idle there).
        idx0 = idx_ref[0, pl.ds(off, _CHUNK_ROWS), :]
        mask = ((recv_segm == intr_segm)
                | (recv_segm == intr_par)
                | (intr_segm == recv_par)) & (idx0 >= 0)

        if num_pairs:
            key = jnp.minimum(recv_segm, intr_segm) | (
                jnp.maximum(recv_segm, intr_segm) << 16)
            for p in range(num_pairs):
                mask = mask | (key == pairs_ref[p])

        out_ref[0, pl.ds(off, _CHUNK_ROWS), :] = jnp.where(mask, -1, idx0)
        out_ref[1, pl.ds(off, _CHUNK_ROWS), :] = jnp.where(
            mask, -1, idx_ref[1, pl.ds(off, _CHUNK_ROWS), :])

    if num_chunks == 1:
        chunk(0)
    else:
        @pl.loop(0, num_chunks)
        def _(c):
            chunk(pl.multiple_of(c * _CHUNK_ROWS, _CHUNK_ROWS))


def _kernel_select(code_ref, pairs_ref, idx_ref, out_ref, *,
                   num_faces, num_pairs):
    _kernel_body(code_ref, pairs_ref, idx_ref, out_ref,
                 num_faces=num_faces, num_pairs=num_pairs, use_gather=False)


def _kernel_gather(pairs_ref, code_ref, idx_ref, out_ref, *,
                   num_faces, num_pairs):
    _kernel_body(code_ref, pairs_ref, idx_ref, out_ref,
                 num_faces=num_faces, num_pairs=num_pairs, use_gather=True)


def filter_faces(collision_idxs, faces_segm, faces_parents, extra_pairs):
    """Same semantics as PyTorch FilterFaces.forward with all buffers present.

    collision_idxs: (B, N, 2) int; faces_segm / faces_parents: (F,) int;
    extra_pairs: (P, 2) int.  Segment / parent ids must fit in 15 bits
    (-1 "no parent" is allowed).  Returns (B, N, 2) in collision_idxs.dtype.
    """
    B, N, _ = collision_idxs.shape
    F = int(faces_segm.shape[0])
    P = int(extra_pairs.shape[0])

    total = B * N
    rows = -(-total // _LANES)
    # Big DMA tiles, but keep >= 2 grid steps when possible (v7x megacore).
    tile_rows = max(_CHUNK_ROWS,
                    min(_MAX_TILE_ROWS,
                        _round_up(-(-rows // 2), _CHUNK_ROWS)))
    rows_pad = _round_up(rows, tile_rows)
    pad = rows_pad * _LANES - total

    # Single lane-dense relayout: (B, N, 2) -> (2, rows_pad, 128).
    flat = jnp.transpose(collision_idxs.astype(jnp.int32), (2, 0, 1))
    flat = flat.reshape(2, total)
    if pad:
        flat = jnp.pad(flat, ((0, 0), (0, pad)), constant_values=-1)
    idx = flat.reshape(2, rows_pad, _LANES)

    # Packed lookup table: low 16 bits = segment id, high bits = parent id.
    code = (faces_segm.astype(jnp.int32) & 0xFFFF) | (
        faces_parents.astype(jnp.int32) << 16)
    # Canonically packed ignore pairs: min | max << 16.
    if P:
        p32 = extra_pairs.astype(jnp.int32)
        pairs_packed = jnp.minimum(p32[:, 0], p32[:, 1]) | (
            jnp.maximum(p32[:, 0], p32[:, 1]) << 16)
    else:
        pairs_packed = jnp.full((1,), -1, jnp.int32)     # never read

    grid = (rows_pad // tile_rows,)
    out_shape = jax.ShapeDtypeStruct((2, rows_pad, _LANES), jnp.int32)
    cparams = pltpu.CompilerParams(dimension_semantics=("parallel",))

    if F <= _GATHER_MIN_FACES:
        kernel = functools.partial(_kernel_select, num_faces=F, num_pairs=P)
        blk = pl.BlockSpec((2, tile_rows, _LANES),
                           lambda i, code_s, pairs_s: (0, i, 0))
        out = pl.pallas_call(
            kernel,
            out_shape=out_shape,
            grid_spec=pltpu.PrefetchScalarGridSpec(
                num_scalar_prefetch=2,
                grid=grid,
                in_specs=[blk],
                out_specs=blk),
            compiler_params=cparams,
        )(code, pairs_packed, idx)
    else:
        F_pad = _round_up(F, _LANES)
        code2d = jnp.pad(code, (0, F_pad - F)).reshape(1, F_pad)
        kernel = functools.partial(_kernel_gather, num_faces=F, num_pairs=P)
        blk = pl.BlockSpec((2, tile_rows, _LANES),
                           lambda i, pairs_s: (0, i, 0))
        out = pl.pallas_call(
            kernel,
            out_shape=out_shape,
            grid_spec=pltpu.PrefetchScalarGridSpec(
                num_scalar_prefetch=1,
                grid=grid,
                in_specs=[pl.BlockSpec((1, F_pad), lambda i, pairs_s: (0, 0)),
                          blk],
                out_specs=blk),
            compiler_params=cparams,
        )(pairs_packed, code2d, idx)

    out = out.reshape(2, rows_pad * _LANES)[:, :total].reshape(2, B, N)
    return jnp.moveaxis(out, 0, -1).astype(collision_idxs.dtype)


def _reference(ci, segm, par, pairs):
    # Pure-JAX replica of the PyTorch forward (for verification).
    F = segm.shape[0]
    i0 = ci[:, :, 0]
    i1 = ci[:, :, 1]
    w0 = jnp.where(i0 < 0, i0 + F, i0)
    w1 = jnp.where(i1 < 0, i1 + F, i1)
    recv_segm = segm[w0]
    intr_segm = segm[w1]
    recv_par = par[w0]
    intr_par = par[w1]
    same = recv_segm == intr_segm
    kin = (recv_segm == intr_par) | (intr_segm == recv_par)
    mask = (same | kin) & (i0 >= 0)
    m1 = jnp.any((recv_segm[..., None] == pairs[None, None, :, 0]) &
                 (intr_segm[..., None] == pairs[None, None, :, 1]), axis=-1)
    m2 = jnp.any((recv_segm[..., None] == pairs[None, None, :, 1]) &
                 (intr_segm[..., None] == pairs[None, None, :, 0]), axis=-1)
    m = (mask | m1 | m2).astype(ci.dtype)[..., None]
    return m * -1 + (1 - m) * ci


def _run_case(key, B, N, F, num_parts, extra_pairs):
    k_ci, k_segm, k_par = jax.random.split(key, 3)
    collision_idxs = jax.random.randint(k_ci, (B, N, 2), -1, F, dtype=jnp.int32)
    faces_segm = jax.random.randint(k_segm, (F,), 0, num_parts, dtype=jnp.int32)
    faces_parents = jax.random.randint(k_par, (F,), 0, num_parts,
                                       dtype=jnp.int32)

    out = filter_faces(collision_idxs, faces_segm, faces_parents, extra_pairs)
    out = jax.block_until_ready(out)

    ref = _reference(collision_idxs, faces_segm, faces_parents, extra_pairs)
    assert out.shape == (B, N, 2) and out.dtype == collision_idxs.dtype
    assert bool(jnp.all(out == ref))


if __name__ == "__main__":
    key = jax.random.PRNGKey(0)
    k1, k2 = jax.random.split(key)

    # Small case: single grid step, single sub-chunk, fully unrolled face loop.
    pairs_small = jnp.array(
        [[0, 1], [2, 3], [4, 5], [1, 4], [0, 3], [2, 5], [3, 4], [1, 5]],
        dtype=jnp.int32)
    _run_case(k1, B=2, N=128, F=64, num_parts=6, extra_pairs=pairs_small)

    # Larger case: 2 grid steps, multi-chunk pl.loop path, fori_loop face loop.
    pairs_big = jnp.array([[0, 1], [2, 3], [9, 10], [4, 7], [5, 6]],
                          dtype=jnp.int32)
    _run_case(k2, B=4, N=2048, F=300, num_parts=11, extra_pairs=pairs_big)

    print("KERNEL_OK")
</pallas_src>

<mosaic_0001>
module attributes {stable_mosaic.version = 11 : i64} {
  func.func @_kernel_select(%arg0: i32, %arg1: memref<64xi32, #tpu.memory_space<smem>>, %arg2: memref<8xi32, #tpu.memory_space<smem>>, %arg3: memref<2x8x128xi32, #tpu.memory_space<vmem>>, %arg4: memref<2x8x128xi32, #tpu.memory_space<vmem>>) attributes {dimension_semantics = [#tpu.dimension_semantics<parallel>], iteration_bounds = array<i64: 1>, scalar_prefetch = 2 : i64, scratch_operands = 0 : i64, tpu.core_type = #tpu.core_type<tc>, window_params = [{transform_indices = @transform_0, window_bounds = array<i64: 2, 8, 128>}, {transform_indices = @transform_1, window_bounds = array<i64: 2, 8, 128>}]} {
    %c0 = arith.constant 0 : index
    %c0_0 = arith.constant 0 : index
    %c0_1 = arith.constant 0 : index
    %0 = vector.load %arg3[%c0, %c0_0, %c0_1] : memref<2x8x128xi32, #tpu.memory_space<vmem>>, vector<1x8x128xi32>
    %1 = vector.shape_cast %0 : vector<1x8x128xi32> to vector<8x128xi32>
    %c1 = arith.constant 1 : index
    %c0_2 = arith.constant 0 : index
    %c0_3 = arith.constant 0 : index
    %2 = vector.load %arg3[%c1, %c0_2, %c0_3] : memref<2x8x128xi32, #tpu.memory_space<vmem>>, vector<1x8x128xi32>
    %3 = vector.shape_cast %2 : vector<1x8x128xi32> to vector<8x128xi32>
    %c0_i32 = arith.constant 0 : i32
    %4 = vector.broadcast %c0_i32 : i32 to vector<8x128xi32>
    %5 = arith.cmpi slt, %1, %4 : vector<8x128xi32>
    %c64_i32 = arith.constant 64 : i32
    %6 = vector.broadcast %c64_i32 : i32 to vector<8x128xi32>
    %7 = arith.addi %1, %6 : vector<8x128xi32>
    %8 = arith.select %5, %7, %1 : vector<8x128xi1>, vector<8x128xi32>
    %c0_i32_4 = arith.constant 0 : i32
    %9 = vector.broadcast %c0_i32_4 : i32 to vector<8x128xi32>
    %10 = arith.cmpi slt, %3, %9 : vector<8x128xi32>
    %c64_i32_5 = arith.constant 64 : i32
    %11 = vector.broadcast %c64_i32_5 : i32 to vector<8x128xi32>
    %12 = arith.addi %3, %11 : vector<8x128xi32>
    %13 = arith.select %10, %12, %3 : vector<8x128xi1>, vector<8x128xi32>
    %c0_i32_6 = arith.constant 0 : i32
    %14 = vector.broadcast %c0_i32_6 : i32 to vector<8x128xi32>
    %c0_7 = arith.constant 0 : index
    %15 = memref.load %arg1[%c0_7] : memref<64xi32, #tpu.memory_space<smem>>
    %c0_i32_8 = arith.constant 0 : i32
    %16 = vector.broadcast %c0_i32_8 : i32 to vector<8x128xi32>
    %17 = arith.cmpi eq, %8, %16 : vector<8x128xi32>
    %18 = vector.broadcast %15 : i32 to vector<8x128xi32>
    %19 = arith.select %17, %18, %14 : vector<8x128xi1>, vector<8x128xi32>
    %c0_i32_9 = arith.constant 0 : i32
    %20 = vector.broadcast %c0_i32_9 : i32 to vector<8x128xi32>
    %21 = arith.cmpi eq, %13, %20 : vector<8x128xi32>
    %22 = vector.broadcast %15 : i32 to vector<8x128xi32>
    %23 = arith.select %21, %22, %14 : vector<8x128xi1>, vector<8x128xi32>
    %c1_10 = arith.constant 1 : index
    %24 = memref.load %arg1[%c1_10] : memref<64xi32, #tpu.memory_space<smem>>
    %c1_i32 = arith.constant 1 : i32
    %25 = vector.broadcast %c1_i32 : i32 to vector<8x128xi32>
    %26 = arith.cmpi eq, %8, %25 : vector<8x128xi32>
    %27 = vector.broadcast %24 : i32 to vector<8x128xi32>
    %28 = arith.select %26, %27, %19 : vector<8x128xi1>, vector<8x128xi32>
    %c1_i32_11 = arith.constant 1 : i32
    %29 = vector.broadcast %c1_i32_11 : i32 to vector<8x128xi32>
    %30 = arith.cmpi eq, %13, %29 : vector<8x128xi32>
    %31 = vector.broadcast %24 : i32 to vector<8x128xi32>
    %32 = arith.select %30, %31, %23 : vector<8x128xi1>, vector<8x128xi32>
    %c2 = arith.constant 2 : index
    %33 = memref.load %arg1[%c2] : memref<64xi32, #tpu.memory_space<smem>>
    %c2_i32 = arith.constant 2 : i32
    %34 = vector.broadcast %c2_i32 : i32 to vector<8x128xi32>
    %35 = arith.cmpi eq, %8, %34 : vector<8x128xi32>
    %36 = vector.broadcast %33 : i32 to vector<8x128xi32>
    %37 = arith.select %35, %36, %28 : vector<8x128xi1>, vector<8x128xi32>
    %c2_i32_12 = arith.constant 2 : i32
    %38 = vector.broadcast %c2_i32_12 : i32 to vector<8x128xi32>
    %39 = arith.cmpi eq, %13, %38 : vector<8x128xi32>
    %40 = vector.broadcast %33 : i32 to vector<8x128xi32>
    %41 = arith.select %39, %40, %32 : vector<8x128xi1>, vector<8x128xi32>
    %c3 = arith.constant 3 : index
    %42 = memref.load %arg1[%c3] : memref<64xi32, #tpu.memory_space<smem>>
    %c3_i32 = arith.constant 3 : i32
    %43 = vector.broadcast %c3_i32 : i32 to vector<8x128xi32>
    %44 = arith.cmpi eq, %8, %43 : vector<8x128xi32>
    %45 = vector.broadcast %42 : i32 to vector<8x128xi32>
    %46 = arith.select %44, %45, %37 : vector<8x128xi1>, vector<8x128xi32>
    %c3_i32_13 = arith.constant 3 : i32
    %47 = vector.broadcast %c3_i32_13 : i32 to vector<8x128xi32>
    %48 = arith.cmpi eq, %13, %47 : vector<8x128xi32>
    %49 = vector.broadcast %42 : i32 to vector<8x128xi32>
    %50 = arith.select %48, %49, %41 : vector<8x128xi1>, vector<8x128xi32>
    %c4 = arith.constant 4 : index
    %51 = memref.load %arg1[%c4] : memref<64xi32, #tpu.memory_space<smem>>
    %c4_i32 = arith.constant 4 : i32
    %52 = vector.broadcast %c4_i32 : i32 to vector<8x128xi32>
    %53 = arith.cmpi eq, %8, %52 : vector<8x128xi32>
    %54 = vector.broadcast %51 : i32 to vector<8x128xi32>
    %55 = arith.select %53, %54, %46 : vector<8x128xi1>, vector<8x128xi32>
    %c4_i32_14 = arith.constant 4 : i32
    %56 = vector.broadcast %c4_i32_14 : i32 to vector<8x128xi32>
    %57 = arith.cmpi eq, %13, %56 : vector<8x128xi32>
    %58 = vector.broadcast %51 : i32 to vector<8x128xi32>
    %59 = arith.select %57, %58, %50 : vector<8x128xi1>, vector<8x128xi32>
    %c5 = arith.constant 5 : index
    %60 = memref.load %arg1[%c5] : memref<64xi32, #tpu.memory_space<smem>>
    %c5_i32 = arith.constant 5 : i32
    %61 = vector.broadcast %c5_i32 : i32 to vector<8x128xi32>
    %62 = arith.cmpi eq, %8, %61 : vector<8x128xi32>
    %63 = vector.broadcast %60 : i32 to vector<8x128xi32>
    %64 = arith.select %62, %63, %55 : vector<8x128xi1>, vector<8x128xi32>
    %c5_i32_15 = arith.constant 5 : i32
    %65 = vector.broadcast %c5_i32_15 : i32 to vector<8x128xi32>
    %66 = arith.cmpi eq, %13, %65 : vector<8x128xi32>
    %67 = vector.broadcast %60 : i32 to vector<8x128xi32>
    %68 = arith.select %66, %67, %59 : vector<8x128xi1>, vector<8x128xi32>
    %c6 = arith.constant 6 : index
    %69 = memref.load %arg1[%c6] : memref<64xi32, #tpu.memory_space<smem>>
    %c6_i32 = arith.constant 6 : i32
    %70 = vector.broadcast %c6_i32 : i32 to vector<8x128xi32>
    %71 = arith.cmpi eq, %8, %70 : vector<8x128xi32>
    %72 = vector.broadcast %69 : i32 to vector<8x128xi32>
    %73 = arith.select %71, %72, %64 : vector<8x128xi1>, vector<8x128xi32>
    %c6_i32_16 = arith.constant 6 : i32
    %74 = vector.broadcast %c6_i32_16 : i32 to vector<8x128xi32>
    %75 = arith.cmpi eq, %13, %74 : vector<8x128xi32>
    %76 = vector.broadcast %69 : i32 to vector<8x128xi32>
    %77 = arith.select %75, %76, %68 : vector<8x128xi1>, vector<8x128xi32>
    %c7 = arith.constant 7 : index
    %78 = memref.load %arg1[%c7] : memref<64xi32, #tpu.memory_space<smem>>
    %c7_i32 = arith.constant 7 : i32
    %79 = vector.broadcast %c7_i32 : i32 to vector<8x128xi32>
    %80 = arith.cmpi eq, %8, %79 : vector<8x128xi32>
    %81 = vector.broadcast %78 : i32 to vector<8x128xi32>
    %82 = arith.select %80, %81, %73 : vector<8x128xi1>, vector<8x128xi32>
    %c7_i32_17 = arith.constant 7 : i32
    %83 = vector.broadcast %c7_i32_17 : i32 to vector<8x128xi32>
    %84 = arith.cmpi eq, %13, %83 : vector<8x128xi32>
    %85 = vector.broadcast %78 : i32 to vector<8x128xi32>
    %86 = arith.select %84, %85, %77 : vector<8x128xi1>, vector<8x128xi32>
    %c8 = arith.constant 8 : index
    %87 = memref.load %arg1[%c8] : memref<64xi32, #tpu.memory_space<smem>>
    %c8_i32 = arith.constant 8 : i32
    %88 = vector.broadcast %c8_i32 : i32 to vector<8x128xi32>
    %89 = arith.cmpi eq, %8, %88 : vector<8x128xi32>
    %90 = vector.broadcast %87 : i32 to vector<8x128xi32>
    %91 = arith.select %89, %90, %82 : vector<8x128xi1>, vector<8x128xi32>
    %c8_i32_18 = arith.constant 8 : i32
    %92 = vector.broadcast %c8_i32_18 : i32 to vector<8x128xi32>
    %93 = arith.cmpi eq, %13, %92 : vector<8x128xi32>
    %94 = vector.broadcast %87 : i32 to vector<8x128xi32>
    %95 = arith.select %93, %94, %86 : vector<8x128xi1>, vector<8x128xi32>
    %c9 = arith.constant 9 : index
    %96 = memref.load %arg1[%c9] : memref<64xi32, #tpu.memory_space<smem>>
    %c9_i32 = arith.constant 9 : i32
    %97 = vector.broadcast %c9_i32 : i32 to vector<8x128xi32>
    %98 = arith.cmpi eq, %8, %97 : vector<8x128xi32>
    %99 = vector.broadcast %96 : i32 to vector<8x128xi32>
    %100 = arith.select %98, %99, %91 : vector<8x128xi1>, vector<8x128xi32>
    %c9_i32_19 = arith.constant 9 : i32
    %101 = vector.broadcast %c9_i32_19 : i32 to vector<8x128xi32>
    %102 = arith.cmpi eq, %13, %101 : vector<8x128xi32>
    %103 = vector.broadcast %96 : i32 to vector<8x128xi32>
    %104 = arith.select %102, %103, %95 : vector<8x128xi1>, vector<8x128xi32>
    %c10 = arith.constant 10 : index
    %105 = memref.load %arg1[%c10] : memref<64xi32, #tpu.memory_space<smem>>
    %c10_i32 = arith.constant 10 : i32
    %106 = vector.broadcast %c10_i32 : i32 to vector<8x128xi32>
    %107 = arith.cmpi eq, %8, %106 : vector<8x128xi32>
    %108 = vector.broadcast %105 : i32 to vector<8x128xi32>
    %109 = arith.select %107, %108, %100 : vector<8x128xi1>, vector<8x128xi32>
    %c10_i32_20 = arith.constant 10 : i32
    %110 = vector.broadcast %c10_i32_20 : i32 to vector<8x128xi32>
    %111 = arith.cmpi eq, %13, %110 : vector<8x128xi32>
    %112 = vector.broadcast %105 : i32 to vector<8x128xi32>
    %113 = arith.select %111, %112, %104 : vector<8x128xi1>, vector<8x128xi32>
    %c11 = arith.constant 11 : index
    %114 = memref.load %arg1[%c11] : memref<64xi32, #tpu.memory_space<smem>>
    %c11_i32 = arith.constant 11 : i32
    %115 = vector.broadcast %c11_i32 : i32 to vector<8x128xi32>
    %116 = arith.cmpi eq, %8, %115 : vector<8x128xi32>
    %117 = vector.broadcast %114 : i32 to vector<8x128xi32>
    %118 = arith.select %116, %117, %109 : vector<8x128xi1>, vector<8x128xi32>
    %c11_i32_21 = arith.constant 11 : i32
    %119 = vector.broadcast %c11_i32_21 : i32 to vector<8x128xi32>
    %120 = arith.cmpi eq, %13, %119 : vector<8x128xi32>
    %121 = vector.broadcast %114 : i32 to vector<8x128xi32>
    %122 = arith.select %120, %121, %113 : vector<8x128xi1>, vector<8x128xi32>
    %c12 = arith.constant 12 : index
    %123 = memref.load %arg1[%c12] : memref<64xi32, #tpu.memory_space<smem>>
    %c12_i32 = arith.constant 12 : i32
    %124 = vector.broadcast %c12_i32 : i32 to vector<8x128xi32>
    %125 = arith.cmpi eq, %8, %124 : vector<8x128xi32>
    %126 = vector.broadcast %123 : i32 to vector<8x128xi32>
    %127 = arith.select %125, %126, %118 : vector<8x128xi1>, vector<8x128xi32>
    %c12_i32_22 = arith.constant 12 : i32
    %128 = vector.broadcast %c12_i32_22 : i32 to vector<8x128xi32>
    %129 = arith.cmpi eq, %13, %128 : vector<8x128xi32>
    %130 = vector.broadcast %123 : i32 to vector<8x128xi32>
    %131 = arith.select %129, %130, %122 : vector<8x128xi1>, vector<8x128xi32>
    %c13 = arith.constant 13 : index
    %132 = memref.load %arg1[%c13] : memref<64xi32, #tpu.memory_space<smem>>
    %c13_i32 = arith.constant 13 : i32
    %133 = vector.broadcast %c13_i32 : i32 to vector<8x128xi32>
    %134 = arith.cmpi eq, %8, %133 : vector<8x128xi32>
    %135 = vector.broadcast %132 : i32 to vector<8x128xi32>
    %136 = arith.select %134, %135, %127 : vector<8x128xi1>, vector<8x128xi32>
    %c13_i32_23 = arith.constant 13 : i32
    %137 = vector.broadcast %c13_i32_23 : i32 to vector<8x128xi32>
    %138 = arith.cmpi eq, %13, %137 : vector<8x128xi32>
    %139 = vector.broadcast %132 : i32 to vector<8x128xi32>
    %140 = arith.select %138, %139, %131 : vector<8x128xi1>, vector<8x128xi32>
    %c14 = arith.constant 14 : index
    %141 = memref.load %arg1[%c14] : memref<64xi32, #tpu.memory_space<smem>>
    %c14_i32 = arith.constant 14 : i32
    %142 = vector.broadcast %c14_i32 : i32 to vector<8x128xi32>
    %143 = arith.cmpi eq, %8, %142 : vector<8x128xi32>
    %144 = vector.broadcast %141 : i32 to vector<8x128xi32>
    %145 = arith.select %143, %144, %136 : vector<8x128xi1>, vector<8x128xi32>
    %c14_i32_24 = arith.constant 14 : i32
    %146 = vector.broadcast %c14_i32_24 : i32 to vector<8x128xi32>
    %147 = arith.cmpi eq, %13, %146 : vector<8x128xi32>
    %148 = vector.broadcast %141 : i32 to vector<8x128xi32>
    %149 = arith.select %147, %148, %140 : vector<8x128xi1>, vector<8x128xi32>
    %c15 = arith.constant 15 : index
    %150 = memref.load %arg1[%c15] : memref<64xi32, #tpu.memory_space<smem>>
    %c15_i32 = arith.constant 15 : i32
    %151 = vector.broadcast %c15_i32 : i32 to vector<8x128xi32>
    %152 = arith.cmpi eq, %8, %151 : vector<8x128xi32>
    %153 = vector.broadcast %150 : i32 to vector<8x128xi32>
    %154 = arith.select %152, %153, %145 : vector<8x128xi1>, vector<8x128xi32>
    %c15_i32_25 = arith.constant 15 : i32
    %155 = vector.broadcast %c15_i32_25 : i32 to vector<8x128xi32>
    %156 = arith.cmpi eq, %13, %155 : vector<8x128xi32>
    %157 = vector.broadcast %150 : i32 to vector<8x128xi32>
    %158 = arith.select %156, %157, %149 : vector<8x128xi1>, vector<8x128xi32>
    %c16 = arith.constant 16 : index
    %159 = memref.load %arg1[%c16] : memref<64xi32, #tpu.memory_space<smem>>
    %c16_i32 = arith.constant 16 : i32
    %160 = vector.broadcast %c16_i32 : i32 to vector<8x128xi32>
    %161 = arith.cmpi eq, %8, %160 : vector<8x128xi32>
    %162 = vector.broadcast %159 : i32 to vector<8x128xi32>
    %163 = arith.select %161, %162, %154 : vector<8x128xi1>, vector<8x128xi32>
    %c16_i32_26 = arith.constant 16 : i32
    %164 = vector.broadcast %c16_i32_26 : i32 to vector<8x128xi32>
    %165 = arith.cmpi eq, %13, %164 : vector<8x128xi32>
    %166 = vector.broadcast %159 : i32 to vector<8x128xi32>
    %167 = arith.select %165, %166, %158 : vector<8x128xi1>, vector<8x128xi32>
    %c17 = arith.constant 17 : index
    %168 = memref.load %arg1[%c17] : memref<64xi32, #tpu.memory_space<smem>>
    %c17_i32 = arith.constant 17 : i32
    %169 = vector.broadcast %c17_i32 : i32 to vector<8x128xi32>
    %170 = arith.cmpi eq, %8, %169 : vector<8x128xi32>
    %171 = vector.broadcast %168 : i32 to vector<8x128xi32>
    %172 = arith.select %170, %171, %163 : vector<8x128xi1>, vector<8x128xi32>
    %c17_i32_27 = arith.constant 17 : i32
    %173 = vector.broadcast %c17_i32_27 : i32 to vector<8x128xi32>
    %174 = arith.cmpi eq, %13, %173 : vector<8x128xi32>
    %175 = vector.broadcast %168 : i32 to vector<8x128xi32>
    %176 = arith.select %174, %175, %167 : vector<8x128xi1>, vector<8x128xi32>
    %c18 = arith.constant 18 : index
    %177 = memref.load %arg1[%c18] : memref<64xi32, #tpu.memory_space<smem>>
    %c18_i32 = arith.constant 18 : i32
    %178 = vector.broadcast %c18_i32 : i32 to vector<8x128xi32>
    %179 = arith.cmpi eq, %8, %178 : vector<8x128xi32>
    %180 = vector.broadcast %177 : i32 to vector<8x128xi32>
    %181 = arith.select %179, %180, %172 : vector<8x128xi1>, vector<8x128xi32>
    %c18_i32_28 = arith.constant 18 : i32
    %182 = vector.broadcast %c18_i32_28 : i32 to vector<8x128xi32>
    %183 = arith.cmpi eq, %13, %182 : vector<8x128xi32>
    %184 = vector.broadcast %177 : i32 to vector<8x128xi32>
    %185 = arith.select %183, %184, %176 : vector<8x128xi1>, vector<8x128xi32>
    %c19 = arith.constant 19 : index
    %186 = memref.load %arg1[%c19] : memref<64xi32, #tpu.memory_space<smem>>
    %c19_i32 = arith.constant 19 : i32
    %187 = vector.broadcast %c19_i32 : i32 to vector<8x128xi32>
    %188 = arith.cmpi eq, %8, %187 : vector<8x128xi32>
    %189 = vector.broadcast %186 : i32 to vector<8x128xi32>
    %190 = arith.select %188, %189, %181 : vector<8x128xi1>, vector<8x128xi32>
    %c19_i32_29 = arith.constant 19 : i32
    %191 = vector.broadcast %c19_i32_29 : i32 to vector<8x128xi32>
    %192 = arith.cmpi eq, %13, %191 : vector<8x128xi32>
    %193 = vector.broadcast %186 : i32 to vector<8x128xi32>
    %194 = arith.select %192, %193, %185 : vector<8x128xi1>, vector<8x128xi32>
    %c20 = arith.constant 20 : index
    %195 = memref.load %arg1[%c20] : memref<64xi32, #tpu.memory_space<smem>>
    %c20_i32 = arith.constant 20 : i32
    %196 = vector.broadcast %c20_i32 : i32 to vector<8x128xi32>
    %197 = arith.cmpi eq, %8, %196 : vector<8x128xi32>
    %198 = vector.broadcast %195 : i32 to vector<8x128xi32>
    %199 = arith.select %197, %198, %190 : vector<8x128xi1>, vector<8x128xi32>
    %c20_i32_30 = arith.constant 20 : i32
    %200 = vector.broadcast %c20_i32_30 : i32 to vector<8x128xi32>
    %201 = arith.cmpi eq, %13, %200 : vector<8x128xi32>
    %202 = vector.broadcast %195 : i32 to vector<8x128xi32>
    %203 = arith.select %201, %202, %194 : vector<8x128xi1>, vector<8x128xi32>
    %c21 = arith.constant 21 : index
    %204 = memref.load %arg1[%c21] : memref<64xi32, #tpu.memory_space<smem>>
    %c21_i32 = arith.constant 21 : i32
    %205 = vector.broadcast %c21_i32 : i32 to vector<8x128xi32>
    %206 = arith.cmpi eq, %8, %205 : vector<8x128xi32>
    %207 = vector.broadcast %204 : i32 to vector<8x128xi32>
    %208 = arith.select %206, %207, %199 : vector<8x128xi1>, vector<8x128xi32>
    %c21_i32_31 = arith.constant 21 : i32
    %209 = vector.broadcast %c21_i32_31 : i32 to vector<8x128xi32>
    %210 = arith.cmpi eq, %13, %209 : vector<8x128xi32>
    %211 = vector.broadcast %204 : i32 to vector<8x128xi32>
    %212 = arith.select %210, %211, %203 : vector<8x128xi1>, vector<8x128xi32>
    %c22 = arith.constant 22 : index
    %213 = memref.load %arg1[%c22] : memref<64xi32, #tpu.memory_space<smem>>
    %c22_i32 = arith.constant 22 : i32
    %214 = vector.broadcast %c22_i32 : i32 to vector<8x128xi32>
    %215 = arith.cmpi eq, %8, %214 : vector<8x128xi32>
    %216 = vector.broadcast %213 : i32 to vector<8x128xi32>
    %217 = arith.select %215, %216, %208 : vector<8x128xi1>, vector<8x128xi32>
    %c22_i32_32 = arith.constant 22 : i32
    %218 = vector.broadcast %c22_i32_32 : i32 to vector<8x128xi32>
    %219 = arith.cmpi eq, %13, %218 : vector<8x128xi32>
    %220 = vector.broadcast %213 : i32 to vector<8x128xi32>
    %221 = arith.select %219, %220, %212 : vector<8x128xi1>, vector<8x128xi32>
    %c23 = arith.constant 23 : index
    %222 = memref.load %arg1[%c23] : memref<64xi32, #tpu.memory_space<smem>>
    %c23_i32 = arith.constant 23 : i32
    %223 = vector.broadcast %c23_i32 : i32 to vector<8x128xi32>
    %224 = arith.cmpi eq, %8, %223 : vector<8x128xi32>
    %225 = vector.broadcast %222 : i32 to vector<8x128xi32>
    %226 = arith.select %224, %225, %217 : vector<8x128xi1>, vector<8x128xi32>
    %c23_i32_33 = arith.constant 23 : i32
    %227 = vector.broadcast %c23_i32_33 : i32 to vector<8x128xi32>
    %228 = arith.cmpi eq, %13, %227 : vector<8x128xi32>
    %229 = vector.broadcast %222 : i32 to vector<8x128xi32>
    %230 = arith.select %228, %229, %221 : vector<8x128xi1>, vector<8x128xi32>
    %c24 = arith.constant 24 : index
    %231 = memref.load %arg1[%c24] : memref<64xi32, #tpu.memory_space<smem>>
    %c24_i32 = arith.constant 24 : i32
    %232 = vector.broadcast %c24_i32 : i32 to vector<8x128xi32>
    %233 = arith.cmpi eq, %8, %232 : vector<8x128xi32>
    %234 = vector.broadcast %231 : i32 to vector<8x128xi32>
    %235 = arith.select %233, %234, %226 : vector<8x128xi1>, vector<8x128xi32>
    %c24_i32_34 = arith.constant 24 : i32
    %236 = vector.broadcast %c24_i32_34 : i32 to vector<8x128xi32>
    %237 = arith.cmpi eq, %13, %236 : vector<8x128xi32>
    %238 = vector.broadcast %231 : i32 to vector<8x128xi32>
    %239 = arith.select %237, %238, %230 : vector<8x128xi1>, vector<8x128xi32>
    %c25 = arith.constant 25 : index
    %240 = memref.load %arg1[%c25] : memref<64xi32, #tpu.memory_space<smem>>
    %c25_i32 = arith.constant 25 : i32
    %241 = vector.broadcast %c25_i32 : i32 to vector<8x128xi32>
    %242 = arith.cmpi eq, %8, %241 : vector<8x128xi32>
    %243 = vector.broadcast %240 : i32 to vector<8x128xi32>
    %244 = arith.select %242, %243, %235 : vector<8x128xi1>, vector<8x128xi32>
    %c25_i32_35 = arith.constant 25 : i32
    %245 = vector.broadcast %c25_i32_35 : i32 to vector<8x128xi32>
    %246 = arith.cmpi eq, %13, %245 : vector<8x128xi32>
    %247 = vector.broadcast %240 : i32 to vector<8x128xi32>
    %248 = arith.select %246, %247, %239 : vector<8x128xi1>, vector<8x128xi32>
    %c26 = arith.constant 26 : index
    %249 = memref.load %arg1[%c26] : memref<64xi32, #tpu.memory_space<smem>>
    %c26_i32 = arith.constant 26 : i32
    %250 = vector.broadcast %c26_i32 : i32 to vector<8x128xi32>
    %251 = arith.cmpi eq, %8, %250 : vector<8x128xi32>
    %252 = vector.broadcast %249 : i32 to vector<8x128xi32>
    %253 = arith.select %251, %252, %244 : vector<8x128xi1>, vector<8x128xi32>
    %c26_i32_36 = arith.constant 26 : i32
    %254 = vector.broadcast %c26_i32_36 : i32 to vector<8x128xi32>
    %255 = arith.cmpi eq, %13, %254 : vector<8x128xi32>
    %256 = vector.broadcast %249 : i32 to vector<8x128xi32>
    %257 = arith.select %255, %256, %248 : vector<8x128xi1>, vector<8x128xi32>
    %c27 = arith.constant 27 : index
    %258 = memref.load %arg1[%c27] : memref<64xi32, #tpu.memory_space<smem>>
    %c27_i32 = arith.constant 27 : i32
    %259 = vector.broadcast %c27_i32 : i32 to vector<8x128xi32>
    %260 = arith.cmpi eq, %8, %259 : vector<8x128xi32>
    %261 = vector.broadcast %258 : i32 to vector<8x128xi32>
    %262 = arith.select %260, %261, %253 : vector<8x128xi1>, vector<8x128xi32>
    %c27_i32_37 = arith.constant 27 : i32
    %263 = vector.broadcast %c27_i32_37 : i32 to vector<8x128xi32>
    %264 = arith.cmpi eq, %13, %263 : vector<8x128xi32>
    %265 = vector.broadcast %258 : i32 to vector<8x128xi32>
    %266 = arith.select %264, %265, %257 : vector<8x128xi1>, vector<8x128xi32>
    %c28 = arith.constant 28 : index
    %267 = memref.load %arg1[%c28] : memref<64xi32, #tpu.memory_space<smem>>
    %c28_i32 = arith.constant 28 : i32
    %268 = vector.broadcast %c28_i32 : i32 to vector<8x128xi32>
    %269 = arith.cmpi eq, %8, %268 : vector<8x128xi32>
    %270 = vector.broadcast %267 : i32 to vector<8x128xi32>
    %271 = arith.select %269, %270, %262 : vector<8x128xi1>, vector<8x128xi32>
    %c28_i32_38 = arith.constant 28 : i32
    %272 = vector.broadcast %c28_i32_38 : i32 to vector<8x128xi32>
    %273 = arith.cmpi eq, %13, %272 : vector<8x128xi32>
    %274 = vector.broadcast %267 : i32 to vector<8x128xi32>
    %275 = arith.select %273, %274, %266 : vector<8x128xi1>, vector<8x128xi32>
    %c29 = arith.constant 29 : index
    %276 = memref.load %arg1[%c29] : memref<64xi32, #tpu.memory_space<smem>>
    %c29_i32 = arith.constant 29 : i32
    %277 = vector.broadcast %c29_i32 : i32 to vector<8x128xi32>
    %278 = arith.cmpi eq, %8, %277 : vector<8x128xi32>
    %279 = vector.broadcast %276 : i32 to vector<8x128xi32>
    %280 = arith.select %278, %279, %271 : vector<8x128xi1>, vector<8x128xi32>
    %c29_i32_39 = arith.constant 29 : i32
    %281 = vector.broadcast %c29_i32_39 : i32 to vector<8x128xi32>
    %282 = arith.cmpi eq, %13, %281 : vector<8x128xi32>
    %283 = vector.broadcast %276 : i32 to vector<8x128xi32>
    %284 = arith.select %282, %283, %275 : vector<8x128xi1>, vector<8x128xi32>
    %c30 = arith.constant 30 : index
    %285 = memref.load %arg1[%c30] : memref<64xi32, #tpu.memory_space<smem>>
    %c30_i32 = arith.constant 30 : i32
    %286 = vector.broadcast %c30_i32 : i32 to vector<8x128xi32>
    %287 = arith.cmpi eq, %8, %286 : vector<8x128xi32>
    %288 = vector.broadcast %285 : i32 to vector<8x128xi32>
    %289 = arith.select %287, %288, %280 : vector<8x128xi1>, vector<8x128xi32>
    %c30_i32_40 = arith.constant 30 : i32
    %290 = vector.broadcast %c30_i32_40 : i32 to vector<8x128xi32>
    %291 = arith.cmpi eq, %13, %290 : vector<8x128xi32>
    %292 = vector.broadcast %285 : i32 to vector<8x128xi32>
    %293 = arith.select %291, %292, %284 : vector<8x128xi1>, vector<8x128xi32>
    %c31 = arith.constant 31 : index
    %294 = memref.load %arg1[%c31] : memref<64xi32, #tpu.memory_space<smem>>
    %c31_i32 = arith.constant 31 : i32
    %295 = vector.broadcast %c31_i32 : i32 to vector<8x128xi32>
    %296 = arith.cmpi eq, %8, %295 : vector<8x128xi32>
    %297 = vector.broadcast %294 : i32 to vector<8x128xi32>
    %298 = arith.select %296, %297, %289 : vector<8x128xi1>, vector<8x128xi32>
    %c31_i32_41 = arith.constant 31 : i32
    %299 = vector.broadcast %c31_i32_41 : i32 to vector<8x128xi32>
    %300 = arith.cmpi eq, %13, %299 : vector<8x128xi32>
    %301 = vector.broadcast %294 : i32 to vector<8x128xi32>
    %302 = arith.select %300, %301, %293 : vector<8x128xi1>, vector<8x128xi32>
    %c32 = arith.constant 32 : index
    %303 = memref.load %arg1[%c32] : memref<64xi32, #tpu.memory_space<smem>>
    %c32_i32 = arith.constant 32 : i32
    %304 = vector.broadcast %c32_i32 : i32 to vector<8x128xi32>
    %305 = arith.cmpi eq, %8, %304 : vector<8x128xi32>
    %306 = vector.broadcast %303 : i32 to vector<8x128xi32>
    %307 = arith.select %305, %306, %298 : vector<8x128xi1>, vector<8x128xi32>
    %c32_i32_42 = arith.constant 32 : i32
    %308 = vector.broadcast %c32_i32_42 : i32 to vector<8x128xi32>
    %309 = arith.cmpi eq, %13, %308 : vector<8x128xi32>
    %310 = vector.broadcast %303 : i32 to vector<8x128xi32>
    %311 = arith.select %309, %310, %302 : vector<8x128xi1>, vector<8x128xi32>
    %c33 = arith.constant 33 : index
    %312 = memref.load %arg1[%c33] : memref<64xi32, #tpu.memory_space<smem>>
    %c33_i32 = arith.constant 33 : i32
    %313 = vector.broadcast %c33_i32 : i32 to vector<8x128xi32>
    %314 = arith.cmpi eq, %8, %313 : vector<8x128xi32>
    %315 = vector.broadcast %312 : i32 to vector<8x128xi32>
    %316 = arith.select %314, %315, %307 : vector<8x128xi1>, vector<8x128xi32>
    %c33_i32_43 = arith.constant 33 : i32
    %317 = vector.broadcast %c33_i32_43 : i32 to vector<8x128xi32>
    %318 = arith.cmpi eq, %13, %317 : vector<8x128xi32>
    %319 = vector.broadcast %312 : i32 to vector<8x128xi32>
    %320 = arith.select %318, %319, %311 : vector<8x128xi1>, vector<8x128xi32>
    %c34 = arith.constant 34 : index
    %321 = memref.load %arg1[%c34] : memref<64xi32, #tpu.memory_space<smem>>
    %c34_i32 = arith.constant 34 : i32
    %322 = vector.broadcast %c34_i32 : i32 to vector<8x128xi32>
    %323 = arith.cmpi eq, %8, %322 : vector<8x128xi32>
    %324 = vector.broadcast %321 : i32 to vector<8x128xi32>
    %325 = arith.select %323, %324, %316 : vector<8x128xi1>, vector<8x128xi32>
    %c34_i32_44 = arith.constant 34 : i32
    %326 = vector.broadcast %c34_i32_44 : i32 to vector<8x128xi32>
    %327 = arith.cmpi eq, %13, %326 : vector<8x128xi32>
    %328 = vector.broadcast %321 : i32 to vector<8x128xi32>
    %329 = arith.select %327, %328, %320 : vector<8x128xi1>, vector<8x128xi32>
    %c35 = arith.constant 35 : index
    %330 = memref.load %arg1[%c35] : memref<64xi32, #tpu.memory_space<smem>>
    %c35_i32 = arith.constant 35 : i32
    %331 = vector.broadcast %c35_i32 : i32 to vector<8x128xi32>
    %332 = arith.cmpi eq, %8, %331 : vector<8x128xi32>
    %333 = vector.broadcast %330 : i32 to vector<8x128xi32>
    %334 = arith.select %332, %333, %325 : vector<8x128xi1>, vector<8x128xi32>
    %c35_i32_45 = arith.constant 35 : i32
    %335 = vector.broadcast %c35_i32_45 : i32 to vector<8x128xi32>
    %336 = arith.cmpi eq, %13, %335 : vector<8x128xi32>
    %337 = vector.broadcast %330 : i32 to vector<8x128xi32>
    %338 = arith.select %336, %337, %329 : vector<8x128xi1>, vector<8x128xi32>
    %c36 = arith.constant 36 : index
    %339 = memref.load %arg1[%c36] : memref<64xi32, #tpu.memory_space<smem>>
    %c36_i32 = arith.constant 36 : i32
    %340 = vector.broadcast %c36_i32 : i32 to vector<8x128xi32>
    %341 = arith.cmpi eq, %8, %340 : vector<8x128xi32>
    %342 = vector.broadcast %339 : i32 to vector<8x128xi32>
    %343 = arith.select %341, %342, %334 : vector<8x128xi1>, vector<8x128xi32>
    %c36_i32_46 = arith.constant 36 : i32
    %344 = vector.broadcast %c36_i32_46 : i32 to vector<8x128xi32>
    %345 = arith.cmpi eq, %13, %344 : vector<8x128xi32>
    %346 = vector.broadcast %339 : i32 to vector<8x128xi32>
    %347 = arith.select %345, %346, %338 : vector<8x128xi1>, vector<8x128xi32>
    %c37 = arith.constant 37 : index
    %348 = memref.load %arg1[%c37] : memref<64xi32, #tpu.memory_space<smem>>
    %c37_i32 = arith.constant 37 : i32
    %349 = vector.broadcast %c37_i32 : i32 to vector<8x128xi32>
    %350 = arith.cmpi eq, %8, %349 : vector<8x128xi32>
    %351 = vector.broadcast %348 : i32 to vector<8x128xi32>
    %352 = arith.select %350, %351, %343 : vector<8x128xi1>, vector<8x128xi32>
    %c37_i32_47 = arith.constant 37 : i32
    %353 = vector.broadcast %c37_i32_47 : i32 to vector<8x128xi32>
    %354 = arith.cmpi eq, %13, %353 : vector<8x128xi32>
    %355 = vector.broadcast %348 : i32 to vector<8x128xi32>
    %356 = arith.select %354, %355, %347 : vector<8x128xi1>, vector<8x128xi32>
    %c38 = arith.constant 38 : index
    %357 = memref.load %arg1[%c38] : memref<64xi32, #tpu.memory_space<smem>>
    %c38_i32 = arith.constant 38 : i32
    %358 = vector.broadcast %c38_i32 : i32 to vector<8x128xi32>
    %359 = arith.cmpi eq, %8, %358 : vector<8x128xi32>
    %360 = vector.broadcast %357 : i32 to vector<8x128xi32>
    %361 = arith.select %359, %360, %352 : vector<8x128xi1>, vector<8x128xi32>
    %c38_i32_48 = arith.constant 38 : i32
    %362 = vector.broadcast %c38_i32_48 : i32 to vector<8x128xi32>
    %363 = arith.cmpi eq, %13, %362 : vector<8x128xi32>
    %364 = vector.broadcast %357 : i32 to vector<8x128xi32>
    %365 = arith.select %363, %364, %356 : vector<8x128xi1>, vector<8x128xi32>
    %c39 = arith.constant 39 : index
    %366 = memref.load %arg1[%c39] : memref<64xi32, #tpu.memory_space<smem>>
    %c39_i32 = arith.constant 39 : i32
    %367 = vector.broadcast %c39_i32 : i32 to vector<8x128xi32>
    %368 = arith.cmpi eq, %8, %367 : vector<8x128xi32>
    %369 = vector.broadcast %366 : i32 to vector<8x128xi32>
    %370 = arith.select %368, %369, %361 : vector<8x128xi1>, vector<8x128xi32>
    %c39_i32_49 = arith.constant 39 : i32
    %371 = vector.broadcast %c39_i32_49 : i32 to vector<8x128xi32>
    %372 = arith.cmpi eq, %13, %371 : vector<8x128xi32>
    %373 = vector.broadcast %366 : i32 to vector<8x128xi32>
    %374 = arith.select %372, %373, %365 : vector<8x128xi1>, vector<8x128xi32>
    %c40 = arith.constant 40 : index
    %375 = memref.load %arg1[%c40] : memref<64xi32, #tpu.memory_space<smem>>
    %c40_i32 = arith.constant 40 : i32
    %376 = vector.broadcast %c40_i32 : i32 to vector<8x128xi32>
    %377 = arith.cmpi eq, %8, %376 : vector<8x128xi32>
    %378 = vector.broadcast %375 : i32 to vector<8x128xi32>
    %379 = arith.select %377, %378, %370 : vector<8x128xi1>, vector<8x128xi32>
    %c40_i32_50 = arith.constant 40 : i32
    %380 = vector.broadcast %c40_i32_50 : i32 to vector<8x128xi32>
    %381 = arith.cmpi eq, %13, %380 : vector<8x128xi32>
    %382 = vector.broadcast %375 : i32 to vector<8x128xi32>
    %383 = arith.select %381, %382, %374 : vector<8x128xi1>, vector<8x128xi32>
    %c41 = arith.constant 41 : index
    %384 = memref.load %arg1[%c41] : memref<64xi32, #tpu.memory_space<smem>>
    %c41_i32 = arith.constant 41 : i32
    %385 = vector.broadcast %c41_i32 : i32 to vector<8x128xi32>
    %386 = arith.cmpi eq, %8, %385 : vector<8x128xi32>
    %387 = vector.broadcast %384 : i32 to vector<8x128xi32>
    %388 = arith.select %386, %387, %379 : vector<8x128xi1>, vector<8x128xi32>
    %c41_i32_51 = arith.constant 41 : i32
    %389 = vector.broadcast %c41_i32_51 : i32 to vector<8x128xi32>
    %390 = arith.cmpi eq, %13, %389 : vector<8x128xi32>
    %391 = vector.broadcast %384 : i32 to vector<8x128xi32>
    %392 = arith.select %390, %391, %383 : vector<8x128xi1>, vector<8x128xi32>
    %c42 = arith.constant 42 : index
    %393 = memref.load %arg1[%c42] : memref<64xi32, #tpu.memory_space<smem>>
    %c42_i32 = arith.constant 42 : i32
    %394 = vector.broadcast %c42_i32 : i32 to vector<8x128xi32>
    %395 = arith.cmpi eq, %8, %394 : vector<8x128xi32>
    %396 = vector.broadcast %393 : i32 to vector<8x128xi32>
    %397 = arith.select %395, %396, %388 : vector<8x128xi1>, vector<8x128xi32>
    %c42_i32_52 = arith.constant 42 : i32
    %398 = vector.broadcast %c42_i32_52 : i32 to vector<8x128xi32>
    %399 = arith.cmpi eq, %13, %398 : vector<8x128xi32>
    %400 = vector.broadcast %393 : i32 to vector<8x128xi32>
    %401 = arith.select %399, %400, %392 : vector<8x128xi1>, vector<8x128xi32>
    %c43 = arith.constant 43 : index
    %402 = memref.load %arg1[%c43] : memref<64xi32, #tpu.memory_space<smem>>
    %c43_i32 = arith.constant 43 : i32
    %403 = vector.broadcast %c43_i32 : i32 to vector<8x128xi32>
    %404 = arith.cmpi eq, %8, %403 : vector<8x128xi32>
    %405 = vector.broadcast %402 : i32 to vector<8x128xi32>
    %406 = arith.select %404, %405, %397 : vector<8x128xi1>, vector<8x128xi32>
    %c43_i32_53 = arith.constant 43 : i32
    %407 = vector.broadcast %c43_i32_53 : i32 to vector<8x128xi32>
    %408 = arith.cmpi eq, %13, %407 : vector<8x128xi32>
    %409 = vector.broadcast %402 : i32 to vector<8x128xi32>
    %410 = arith.select %408, %409, %401 : vector<8x128xi1>, vector<8x128xi32>
    %c44 = arith.constant 44 : index
    %411 = memref.load %arg1[%c44] : memref<64xi32, #tpu.memory_space<smem>>
    %c44_i32 = arith.constant 44 : i32
    %412 = vector.broadcast %c44_i32 : i32 to vector<8x128xi32>
    %413 = arith.cmpi eq, %8, %412 : vector<8x128xi32>
    %414 = vector.broadcast %411 : i32 to vector<8x128xi32>
    %415 = arith.select %413, %414, %406 : vector<8x128xi1>, vector<8x128xi32>
    %c44_i32_54 = arith.constant 44 : i32
    %416 = vector.broadcast %c44_i32_54 : i32 to vector<8x128xi32>
    %417 = arith.cmpi eq, %13, %416 : vector<8x128xi32>
    %418 = vector.broadcast %411 : i32 to vector<8x128xi32>
    %419 = arith.select %417, %418, %410 : vector<8x128xi1>, vector<8x128xi32>
    %c45 = arith.constant 45 : index
    %420 = memref.load %arg1[%c45] : memref<64xi32, #tpu.memory_space<smem>>
    %c45_i32 = arith.constant 45 : i32
    %421 = vector.broadcast %c45_i32 : i32 to vector<8x128xi32>
    %422 = arith.cmpi eq, %8, %421 : vector<8x128xi32>
    %423 = vector.broadcast %420 : i32 to vector<8x128xi32>
    %424 = arith.select %422, %423, %415 : vector<8x128xi1>, vector<8x128xi32>
    %c45_i32_55 = arith.constant 45 : i32
    %425 = vector.broadcast %c45_i32_55 : i32 to vector<8x128xi32>
    %426 = arith.cmpi eq, %13, %425 : vector<8x128xi32>
    %427 = vector.broadcast %420 : i32 to vector<8x128xi32>
    %428 = arith.select %426, %427, %419 : vector<8x128xi1>, vector<8x128xi32>
    %c46 = arith.constant 46 : index
    %429 = memref.load %arg1[%c46] : memref<64xi32, #tpu.memory_space<smem>>
    %c46_i32 = arith.constant 46 : i32
    %430 = vector.broadcast %c46_i32 : i32 to vector<8x128xi32>
    %431 = arith.cmpi eq, %8, %430 : vector<8x128xi32>
    %432 = vector.broadcast %429 : i32 to vector<8x128xi32>
    %433 = arith.select %431, %432, %424 : vector<8x128xi1>, vector<8x128xi32>
    %c46_i32_56 = arith.constant 46 : i32
    %434 = vector.broadcast %c46_i32_56 : i32 to vector<8x128xi32>
    %435 = arith.cmpi eq, %13, %434 : vector<8x128xi32>
    %436 = vector.broadcast %429 : i32 to vector<8x128xi32>
    %437 = arith.select %435, %436, %428 : vector<8x128xi1>, vector<8x128xi32>
    %c47 = arith.constant 47 : index
    %438 = memref.load %arg1[%c47] : memref<64xi32, #tpu.memory_space<smem>>
    %c47_i32 = arith.constant 47 : i32
    %439 = vector.broadcast %c47_i32 : i32 to vector<8x128xi32>
    %440 = arith.cmpi eq, %8, %439 : vector<8x128xi32>
    %441 = vector.broadcast %438 : i32 to vector<8x128xi32>
    %442 = arith.select %440, %441, %433 : vector<8x128xi1>, vector<8x128xi32>
    %c47_i32_57 = arith.constant 47 : i32
    %443 = vector.broadcast %c47_i32_57 : i32 to vector<8x128xi32>
    %444 = arith.cmpi eq, %13, %443 : vector<8x128xi32>
    %445 = vector.broadcast %438 : i32 to vector<8x128xi32>
    %446 = arith.select %444, %445, %437 : vector<8x128xi1>, vector<8x128xi32>
    %c48 = arith.constant 48 : index
    %447 = memref.load %arg1[%c48] : memref<64xi32, #tpu.memory_space<smem>>
    %c48_i32 = arith.constant 48 : i32
    %448 = vector.broadcast %c48_i32 : i32 to vector<8x128xi32>
    %449 = arith.cmpi eq, %8, %448 : vector<8x128xi32>
    %450 = vector.broadcast %447 : i32 to vector<8x128xi32>
    %451 = arith.select %449, %450, %442 : vector<8x128xi1>, vector<8x128xi32>
    %c48_i32_58 = arith.constant 48 : i32
    %452 = vector.broadcast %c48_i32_58 : i32 to vector<8x128xi32>
    %453 = arith.cmpi eq, %13, %452 : vector<8x128xi32>
    %454 = vector.broadcast %447 : i32 to vector<8x128xi32>
    %455 = arith.select %453, %454, %446 : vector<8x128xi1>, vector<8x128xi32>
    %c49 = arith.constant 49 : index
    %456 = memref.load %arg1[%c49] : memref<64xi32, #tpu.memory_space<smem>>
    %c49_i32 = arith.constant 49 : i32
    %457 = vector.broadcast %c49_i32 : i32 to vector<8x128xi32>
    %458 = arith.cmpi eq, %8, %457 : vector<8x128xi32>
    %459 = vector.broadcast %456 : i32 to vector<8x128xi32>
    %460 = arith.select %458, %459, %451 : vector<8x128xi1>, vector<8x128xi32>
    %c49_i32_59 = arith.constant 49 : i32
    %461 = vector.broadcast %c49_i32_59 : i32 to vector<8x128xi32>
    %462 = arith.cmpi eq, %13, %461 : vector<8x128xi32>
    %463 = vector.broadcast %456 : i32 to vector<8x128xi32>
    %464 = arith.select %462, %463, %455 : vector<8x128xi1>, vector<8x128xi32>
    %c50 = arith.constant 50 : index
    %465 = memref.load %arg1[%c50] : memref<64xi32, #tpu.memory_space<smem>>
    %c50_i32 = arith.constant 50 : i32
    %466 = vector.broadcast %c50_i32 : i32 to vector<8x128xi32>
    %467 = arith.cmpi eq, %8, %466 : vector<8x128xi32>
    %468 = vector.broadcast %465 : i32 to vector<8x128xi32>
    %469 = arith.select %467, %468, %460 : vector<8x128xi1>, vector<8x128xi32>
    %c50_i32_60 = arith.constant 50 : i32
    %470 = vector.broadcast %c50_i32_60 : i32 to vector<8x128xi32>
    %471 = arith.cmpi eq, %13, %470 : vector<8x128xi32>
    %472 = vector.broadcast %465 : i32 to vector<8x128xi32>
    %473 = arith.select %471, %472, %464 : vector<8x128xi1>, vector<8x128xi32>
    %c51 = arith.constant 51 : index
    %474 = memref.load %arg1[%c51] : memref<64xi32, #tpu.memory_space<smem>>
    %c51_i32 = arith.constant 51 : i32
    %475 = vector.broadcast %c51_i32 : i32 to vector<8x128xi32>
    %476 = arith.cmpi eq, %8, %475 : vector<8x128xi32>
    %477 = vector.broadcast %474 : i32 to vector<8x128xi32>
    %478 = arith.select %476, %477, %469 : vector<8x128xi1>, vector<8x128xi32>
    %c51_i32_61 = arith.constant 51 : i32
    %479 = vector.broadcast %c51_i32_61 : i32 to vector<8x128xi32>
    %480 = arith.cmpi eq, %13, %479 : vector<8x128xi32>
    %481 = vector.broadcast %474 : i32 to vector<8x128xi32>
    %482 = arith.select %480, %481, %473 : vector<8x128xi1>, vector<8x128xi32>
    %c52 = arith.constant 52 : index
    %483 = memref.load %arg1[%c52] : memref<64xi32, #tpu.memory_space<smem>>
    %c52_i32 = arith.constant 52 : i32
    %484 = vector.broadcast %c52_i32 : i32 to vector<8x128xi32>
    %485 = arith.cmpi eq, %8, %484 : vector<8x128xi32>
    %486 = vector.broadcast %483 : i32 to vector<8x128xi32>
    %487 = arith.select %485, %486, %478 : vector<8x128xi1>, vector<8x128xi32>
    %c52_i32_62 = arith.constant 52 : i32
    %488 = vector.broadcast %c52_i32_62 : i32 to vector<8x128xi32>
    %489 = arith.cmpi eq, %13, %488 : vector<8x128xi32>
    %490 = vector.broadcast %483 : i32 to vector<8x128xi32>
    %491 = arith.select %489, %490, %482 : vector<8x128xi1>, vector<8x128xi32>
    %c53 = arith.constant 53 : index
    %492 = memref.load %arg1[%c53] : memref<64xi32, #tpu.memory_space<smem>>
    %c53_i32 = arith.constant 53 : i32
    %493 = vector.broadcast %c53_i32 : i32 to vector<8x128xi32>
    %494 = arith.cmpi eq, %8, %493 : vector<8x128xi32>
    %495 = vector.broadcast %492 : i32 to vector<8x128xi32>
    %496 = arith.select %494, %495, %487 : vector<8x128xi1>, vector<8x128xi32>
    %c53_i32_63 = arith.constant 53 : i32
    %497 = vector.broadcast %c53_i32_63 : i32 to vector<8x128xi32>
    %498 = arith.cmpi eq, %13, %497 : vector<8x128xi32>
    %499 = vector.broadcast %492 : i32 to vector<8x128xi32>
    %500 = arith.select %498, %499, %491 : vector<8x128xi1>, vector<8x128xi32>
    %c54 = arith.constant 54 : index
    %501 = memref.load %arg1[%c54] : memref<64xi32, #tpu.memory_space<smem>>
    %c54_i32 = arith.constant 54 : i32
    %502 = vector.broadcast %c54_i32 : i32 to vector<8x128xi32>
    %503 = arith.cmpi eq, %8, %502 : vector<8x128xi32>
    %504 = vector.broadcast %501 : i32 to vector<8x128xi32>
    %505 = arith.select %503, %504, %496 : vector<8x128xi1>, vector<8x128xi32>
    %c54_i32_64 = arith.constant 54 : i32
    %506 = vector.broadcast %c54_i32_64 : i32 to vector<8x128xi32>
    %507 = arith.cmpi eq, %13, %506 : vector<8x128xi32>
    %508 = vector.broadcast %501 : i32 to vector<8x128xi32>
    %509 = arith.select %507, %508, %500 : vector<8x128xi1>, vector<8x128xi32>
    %c55 = arith.constant 55 : index
    %510 = memref.load %arg1[%c55] : memref<64xi32, #tpu.memory_space<smem>>
    %c55_i32 = arith.constant 55 : i32
    %511 = vector.broadcast %c55_i32 : i32 to vector<8x128xi32>
    %512 = arith.cmpi eq, %8, %511 : vector<8x128xi32>
    %513 = vector.broadcast %510 : i32 to vector<8x128xi32>
    %514 = arith.select %512, %513, %505 : vector<8x128xi1>, vector<8x128xi32>
    %c55_i32_65 = arith.constant 55 : i32
    %515 = vector.broadcast %c55_i32_65 : i32 to vector<8x128xi32>
    %516 = arith.cmpi eq, %13, %515 : vector<8x128xi32>
    %517 = vector.broadcast %510 : i32 to vector<8x128xi32>
    %518 = arith.select %516, %517, %509 : vector<8x128xi1>, vector<8x128xi32>
    %c56 = arith.constant 56 : index
    %519 = memref.load %arg1[%c56] : memref<64xi32, #tpu.memory_space<smem>>
    %c56_i32 = arith.constant 56 : i32
    %520 = vector.broadcast %c56_i32 : i32 to vector<8x128xi32>
    %521 = arith.cmpi eq, %8, %520 : vector<8x128xi32>
    %522 = vector.broadcast %519 : i32 to vector<8x128xi32>
    %523 = arith.select %521, %522, %514 : vector<8x128xi1>, vector<8x128xi32>
    %c56_i32_66 = arith.constant 56 : i32
    %524 = vector.broadcast %c56_i32_66 : i32 to vector<8x128xi32>
    %525 = arith.cmpi eq, %13, %524 : vector<8x128xi32>
    %526 = vector.broadcast %519 : i32 to vector<8x128xi32>
    %527 = arith.select %525, %526, %518 : vector<8x128xi1>, vector<8x128xi32>
    %c57 = arith.constant 57 : index
    %528 = memref.load %arg1[%c57] : memref<64xi32, #tpu.memory_space<smem>>
    %c57_i32 = arith.constant 57 : i32
    %529 = vector.broadcast %c57_i32 : i32 to vector<8x128xi32>
    %530 = arith.cmpi eq, %8, %529 : vector<8x128xi32>
    %531 = vector.broadcast %528 : i32 to vector<8x128xi32>
    %532 = arith.select %530, %531, %523 : vector<8x128xi1>, vector<8x128xi32>
    %c57_i32_67 = arith.constant 57 : i32
    %533 = vector.broadcast %c57_i32_67 : i32 to vector<8x128xi32>
    %534 = arith.cmpi eq, %13, %533 : vector<8x128xi32>
    %535 = vector.broadcast %528 : i32 to vector<8x128xi32>
    %536 = arith.select %534, %535, %527 : vector<8x128xi1>, vector<8x128xi32>
    %c58 = arith.constant 58 : index
    %537 = memref.load %arg1[%c58] : memref<64xi32, #tpu.memory_space<smem>>
    %c58_i32 = arith.constant 58 : i32
    %538 = vector.broadcast %c58_i32 : i32 to vector<8x128xi32>
    %539 = arith.cmpi eq, %8, %538 : vector<8x128xi32>
    %540 = vector.broadcast %537 : i32 to vector<8x128xi32>
    %541 = arith.select %539, %540, %532 : vector<8x128xi1>, vector<8x128xi32>
    %c58_i32_68 = arith.constant 58 : i32
    %542 = vector.broadcast %c58_i32_68 : i32 to vector<8x128xi32>
    %543 = arith.cmpi eq, %13, %542 : vector<8x128xi32>
    %544 = vector.broadcast %537 : i32 to vector<8x128xi32>
    %545 = arith.select %543, %544, %536 : vector<8x128xi1>, vector<8x128xi32>
    %c59 = arith.constant 59 : index
    %546 = memref.load %arg1[%c59] : memref<64xi32, #tpu.memory_space<smem>>
    %c59_i32 = arith.constant 59 : i32
    %547 = vector.broadcast %c59_i32 : i32 to vector<8x128xi32>
    %548 = arith.cmpi eq, %8, %547 : vector<8x128xi32>
    %549 = vector.broadcast %546 : i32 to vector<8x128xi32>
    %550 = arith.select %548, %549, %541 : vector<8x128xi1>, vector<8x128xi32>
    %c59_i32_69 = arith.constant 59 : i32
    %551 = vector.broadcast %c59_i32_69 : i32 to vector<8x128xi32>
    %552 = arith.cmpi eq, %13, %551 : vector<8x128xi32>
    %553 = vector.broadcast %546 : i32 to vector<8x128xi32>
    %554 = arith.select %552, %553, %545 : vector<8x128xi1>, vector<8x128xi32>
    %c60 = arith.constant 60 : index
    %555 = memref.load %arg1[%c60] : memref<64xi32, #tpu.memory_space<smem>>
    %c60_i32 = arith.constant 60 : i32
    %556 = vector.broadcast %c60_i32 : i32 to vector<8x128xi32>
    %557 = arith.cmpi eq, %8, %556 : vector<8x128xi32>
    %558 = vector.broadcast %555 : i32 to vector<8x128xi32>
    %559 = arith.select %557, %558, %550 : vector<8x128xi1>, vector<8x128xi32>
    %c60_i32_70 = arith.constant 60 : i32
    %560 = vector.broadcast %c60_i32_70 : i32 to vector<8x128xi32>
    %561 = arith.cmpi eq, %13, %560 : vector<8x128xi32>
    %562 = vector.broadcast %555 : i32 to vector<8x128xi32>
    %563 = arith.select %561, %562, %554 : vector<8x128xi1>, vector<8x128xi32>
    %c61 = arith.constant 61 : index
    %564 = memref.load %arg1[%c61] : memref<64xi32, #tpu.memory_space<smem>>
    %c61_i32 = arith.constant 61 : i32
    %565 = vector.broadcast %c61_i32 : i32 to vector<8x128xi32>
    %566 = arith.cmpi eq, %8, %565 : vector<8x128xi32>
    %567 = vector.broadcast %564 : i32 to vector<8x128xi32>
    %568 = arith.select %566, %567, %559 : vector<8x128xi1>, vector<8x128xi32>
    %c61_i32_71 = arith.constant 61 : i32
    %569 = vector.broadcast %c61_i32_71 : i32 to vector<8x128xi32>
    %570 = arith.cmpi eq, %13, %569 : vector<8x128xi32>
    %571 = vector.broadcast %564 : i32 to vector<8x128xi32>
    %572 = arith.select %570, %571, %563 : vector<8x128xi1>, vector<8x128xi32>
    %c62 = arith.constant 62 : index
    %573 = memref.load %arg1[%c62] : memref<64xi32, #tpu.memory_space<smem>>
    %c62_i32 = arith.constant 62 : i32
    %574 = vector.broadcast %c62_i32 : i32 to vector<8x128xi32>
    %575 = arith.cmpi eq, %8, %574 : vector<8x128xi32>
    %576 = vector.broadcast %573 : i32 to vector<8x128xi32>
    %577 = arith.select %575, %576, %568 : vector<8x128xi1>, vector<8x128xi32>
    %c62_i32_72 = arith.constant 62 : i32
    %578 = vector.broadcast %c62_i32_72 : i32 to vector<8x128xi32>
    %579 = arith.cmpi eq, %13, %578 : vector<8x128xi32>
    %580 = vector.broadcast %573 : i32 to vector<8x128xi32>
    %581 = arith.select %579, %580, %572 : vector<8x128xi1>, vector<8x128xi32>
    %c63 = arith.constant 63 : index
    %582 = memref.load %arg1[%c63] : memref<64xi32, #tpu.memory_space<smem>>
    %c63_i32 = arith.constant 63 : i32
    %583 = vector.broadcast %c63_i32 : i32 to vector<8x128xi32>
    %584 = arith.cmpi eq, %8, %583 : vector<8x128xi32>
    %585 = vector.broadcast %582 : i32 to vector<8x128xi32>
    %586 = arith.select %584, %585, %577 : vector<8x128xi1>, vector<8x128xi32>
    %c63_i32_73 = arith.constant 63 : i32
    %587 = vector.broadcast %c63_i32_73 : i32 to vector<8x128xi32>
    %588 = arith.cmpi eq, %13, %587 : vector<8x128xi32>
    %589 = vector.broadcast %582 : i32 to vector<8x128xi32>
    %590 = arith.select %588, %589, %581 : vector<8x128xi1>, vector<8x128xi32>
    %c65535_i32 = arith.constant 65535 : i32
    %591 = vector.broadcast %c65535_i32 : i32 to vector<8x128xi32>
    %592 = arith.andi %586, %591 : vector<8x128xi32>
    %c65535_i32_74 = arith.constant 65535 : i32
    %593 = vector.broadcast %c65535_i32_74 : i32 to vector<8x128xi32>
    %594 = arith.andi %590, %593 : vector<8x128xi32>
    %c16_i32_75 = arith.constant 16 : i32
    %595 = vector.broadcast %c16_i32_75 : i32 to vector<8x128xi32>
    %596 = arith.shrsi %586, %595 : vector<8x128xi32>
    %c16_i32_76 = arith.constant 16 : i32
    %597 = vector.broadcast %c16_i32_76 : i32 to vector<8x128xi32>
    %598 = arith.shrsi %590, %597 : vector<8x128xi32>
    %c0_77 = arith.constant 0 : index
    %c0_78 = arith.constant 0 : index
    %c0_79 = arith.constant 0 : index
    %599 = vector.load %arg3[%c0_77, %c0_78, %c0_79] : memref<2x8x128xi32, #tpu.memory_space<vmem>>, vector<1x8x128xi32>
    %600 = vector.shape_cast %599 : vector<1x8x128xi32> to vector<8x128xi32>
    %601 = arith.cmpi eq, %592, %594 : vector<8x128xi32>
    %602 = arith.cmpi eq, %592, %598 : vector<8x128xi32>
    %603 = arith.ori %601, %602 : vector<8x128xi1>
    %604 = arith.cmpi eq, %594, %596 : vector<8x128xi32>
    %605 = arith.ori %603, %604 : vector<8x128xi1>
    %c0_i32_80 = arith.constant 0 : i32
    %606 = vector.broadcast %c0_i32_80 : i32 to vector<8x128xi32>
    %607 = arith.cmpi sge, %600, %606 : vector<8x128xi32>
    %608 = arith.andi %605, %607 : vector<8x128xi1>
    %609 = arith.minsi %592, %594 : vector<8x128xi32>
    %610 = arith.maxsi %592, %594 : vector<8x128xi32>
    %c16_i32_81 = arith.constant 16 : i32
    %611 = vector.broadcast %c16_i32_81 : i32 to vector<8x128xi32>
    %612 = arith.shli %610, %611 : vector<8x128xi32>
    %613 = arith.ori %609, %612 : vector<8x128xi32>
    %c0_82 = arith.constant 0 : index
    %614 = memref.load %arg2[%c0_82] : memref<8xi32, #tpu.memory_space<smem>>
    %615 = vector.broadcast %614 : i32 to vector<8x128xi32>
    %616 = arith.cmpi eq, %613, %615 : vector<8x128xi32>
    %617 = arith.ori %608, %616 : vector<8x128xi1>
    %c1_83 = arith.constant 1 : index
    %618 = memref.load %arg2[%c1_83] : memref<8xi32, #tpu.memory_space<smem>>
    %619 = vector.broadcast %618 : i32 to vector<8x128xi32>
    %620 = arith.cmpi eq, %613, %619 : vector<8x128xi32>
    %621 = arith.ori %617, %620 : vector<8x128xi1>
    %c2_84 = arith.constant 2 : index
    %622 = memref.load %arg2[%c2_84] : memref<8xi32, #tpu.memory_space<smem>>
    %623 = vector.broadcast %622 : i32 to vector<8x128xi32>
    %624 = arith.cmpi eq, %613, %623 : vector<8x128xi32>
    %625 = arith.ori %621, %624 : vector<8x128xi1>
    %c3_85 = arith.constant 3 : index
    %626 = memref.load %arg2[%c3_85] : memref<8xi32, #tpu.memory_space<smem>>
    %627 = vector.broadcast %626 : i32 to vector<8x128xi32>
    %628 = arith.cmpi eq, %613, %627 : vector<8x128xi32>
    %629 = arith.ori %625, %628 : vector<8x128xi1>
    %c4_86 = arith.constant 4 : index
    %630 = memref.load %arg2[%c4_86] : memref<8xi32, #tpu.memory_space<smem>>
    %631 = vector.broadcast %630 : i32 to vector<8x128xi32>
    %632 = arith.cmpi eq, %613, %631 : vector<8x128xi32>
    %633 = arith.ori %629, %632 : vector<8x128xi1>
    %c5_87 = arith.constant 5 : index
    %634 = memref.load %arg2[%c5_87] : memref<8xi32, #tpu.memory_space<smem>>
    %635 = vector.broadcast %634 : i32 to vector<8x128xi32>
    %636 = arith.cmpi eq, %613, %635 : vector<8x128xi32>
    %637 = arith.ori %633, %636 : vector<8x128xi1>
    %c6_88 = arith.constant 6 : index
    %638 = memref.load %arg2[%c6_88] : memref<8xi32, #tpu.memory_space<smem>>
    %639 = vector.broadcast %638 : i32 to vector<8x128xi32>
    %640 = arith.cmpi eq, %613, %639 : vector<8x128xi32>
    %641 = arith.ori %637, %640 : vector<8x128xi1>
    %c7_89 = arith.constant 7 : index
    %642 = memref.load %arg2[%c7_89] : memref<8xi32, #tpu.memory_space<smem>>
    %643 = vector.broadcast %642 : i32 to vector<8x128xi32>
    %644 = arith.cmpi eq, %613, %643 : vector<8x128xi32>
    %645 = arith.ori %641, %644 : vector<8x128xi1>
    %c-1_i32 = arith.constant -1 : i32
    %646 = vector.broadcast %c-1_i32 : i32 to vector<8x128xi32>
    %647 = arith.select %645, %646, %600 : vector<8x128xi1>, vector<8x128xi32>
    %c0_90 = arith.constant 0 : index
    %c0_91 = arith.constant 0 : index
    %c0_92 = arith.constant 0 : index
    %648 = vector.load %arg4[%c0_90, %c0_91, %c0_92] : memref<2x8x128xi32, #tpu.memory_space<vmem>>, vector<1x8x128xi32>
    %649 = vector.shape_cast %648 : vector<1x8x128xi32> to vector<8x128xi32>
    %650 = vector.shape_cast %647 : vector<8x128xi32> to vector<1x8x128xi32>
    tpu.vector_store %arg4[%c0_90, %c0_91, %c0_92], %650 {strides = array<i32>} : memref<2x8x128xi32, #tpu.memory_space<vmem>>, vector<1x8x128xi32>,
    %c1_93 = arith.constant 1 : index
    %c0_94 = arith.constant 0 : index
    %c0_95 = arith.constant 0 : index
    %651 = vector.load %arg3[%c1_93, %c0_94, %c0_95] : memref<2x8x128xi32, #tpu.memory_space<vmem>>, vector<1x8x128xi32>
    %652 = vector.shape_cast %651 : vector<1x8x128xi32> to vector<8x128xi32>
    %c-1_i32_96 = arith.constant -1 : i32
    %653 = vector.broadcast %c-1_i32_96 : i32 to vector<8x128xi32>
    %654 = arith.select %645, %653, %652 : vector<8x128xi1>, vector<8x128xi32>
    %c1_97 = arith.constant 1 : index
    %c0_98 = arith.constant 0 : index
    %c0_99 = arith.constant 0 : index
    %655 = vector.load %arg4[%c1_97, %c0_98, %c0_99] : memref<2x8x128xi32, #tpu.memory_space<vmem>>, vector<1x8x128xi32>
    %656 = vector.shape_cast %655 : vector<1x8x128xi32> to vector<8x128xi32>
    %657 = vector.shape_cast %654 : vector<8x128xi32> to vector<1x8x128xi32>
    tpu.vector_store %arg4[%c1_97, %c0_98, %c0_99], %657 {strides = array<i32>} : memref<2x8x128xi32, #tpu.memory_space<vmem>>, vector<1x8x128xi32>,
    return
  }
  func.func @transform_0(%arg0: i32, %arg1: memref<64xi32, #tpu.memory_space<smem>>, %arg2: memref<8xi32, #tpu.memory_space<smem>>) -> (i32, i32, i32) {
    %c0_i32 = arith.constant 0 : i32
    %c0_i32_0 = arith.constant 0 : i32
    %c0_i32_1 = arith.constant 0 : i32
    return %c0_i32, %arg0, %c0_i32_0 : i32, i32, i32
  }
  func.func @transform_1(%arg0: i32, %arg1: memref<64xi32, #tpu.memory_space<smem>>, %arg2: memref<8xi32, #tpu.memory_space<smem>>) -> (i32, i32, i32) {
    %c0_i32 = arith.constant 0 : i32
    %c0_i32_0 = arith.constant 0 : i32
    %c0_i32_1 = arith.constant 0 : i32
    return %c0_i32, %arg0, %c0_i32_0 : i32, i32, i32
  }
}

</mosaic_0001>

<llo_original>
// kernel: tpu_custom_call.1
$region0: #{tpu_custom_call.1}
  #allocation0 [shape = 'u32[]', space=smem, size = 0x4, offset = 0x4, fixed_abs, tag = 'smem constant byte address 0x4 - core index']
  #allocation1 [shape = 'u32[144,128]{1,0:T(1,128)}', space=vmem, size = 0x12000, scoped, tag = 'internal scratch']
  #allocation2 [shape = 's32[1]{0}', space=sflag, size = 0x4, scoped, tag = 'scoped memory for tpu_custom_call.1']
  #allocation3 [shape = 'u8[512]{0}', space=smem, size = 0x200, scoped, tag = 'prefetched SMEM operand 0']
  #allocation4 [shape = 'u8[512]{0}', space=smem, size = 0x200, scoped, tag = 'prefetched SMEM operand 1']
  %s0 = inlined_call_operand.hbm [shape: s32[64], index: 0, kind: input, shape index: {}]
  %s1 = inlined_call_operand.vmem [shape: s32[8], index: 1, kind: input, shape index: {}]
  %s2 = inlined_call_operand.hbm [shape: s32[2,8,128], index: 2, kind: input, shape index: {}]
  %s3 = inlined_call_operand.hbm [shape: s32[2,8,128], index: 3, kind: output, shape index: {}]
  %s4 = sld [smem:[#allocation0]]
  $region18: #{tpu_custom_call.1} parent=0
    _
  %s6 = ssub.s32 1, %s4
  %s7 = scalar_select 0, %s6, %s4
  %9 = dma.hbm_to_smem %s0, 16, [#allocation3], [#allocation2]
  %s10 = sshll.u32 %s1, 4
  %s11 = int_to_ptr.vmem [resolvable:$true] %s10
  %13 = dma.vmem_to_smem %s11, 16, [#allocation4], [#allocation2]
  %14 = dma.done [#allocation2], 32
  %15 = sfence
  $region1: #{tpu_custom_call.1} parent=0
    #allocation5 [shape = 'u8[8192]{0}', space=vmem, size = 0x2000, scoped, tag = 'input window, operand 2, single buffered']
    #allocation6 [shape = 's32[1]{0}', space=sflag, size = 0x4, scoped, tag = 'scoped memory for tpu_custom_call.1']
    #allocation7 [shape = 's32[1]{0}', space=sflag, size = 0x4, scoped, tag = 'scoped memory for tpu_custom_call.1']
    #allocation8 [shape = 'u8[8192]{0}', space=vmem, size = 0x2000, scoped, tag = 'output window, operand 0, single buffered']
    %16 = vsyncpa [#allocation6], 0
    %17 = vsyncpa [#allocation7], 0
    // Predicated region
    $region2: #{tpu_custom_call.1} parent=1 // pred_check
      _
    $region3: #{tpu_custom_call.1} parent=1 // pred_check_branch
      %19 = sbr.rel (0) target = $region5
    $region4: #{tpu_custom_call.1} parent=1 // pred_region
      %s21 = ssub.s32 256, 256
      %22 = vsyncadd [#allocation6], %s21
      %s23 = sshll.u32 [#allocation5], 4
      %s24 = int_to_ptr.vmem [resolvable:$true] %s23
      %29 = dma.hbm_to_vmem [thread:$0]  %s2, 256, %s24, [#allocation6], 128, 128, 8
    $region5: #{tpu_custom_call.1} parent=1 // pred_fallthru
      _
    // Predicated region
    $region6: #{tpu_custom_call.1} parent=1 // pred_check
      _
    $region7: #{tpu_custom_call.1} parent=1 // pred_check_branch
      %31 = sbr.rel (0) target = $region9
    $region8: #{tpu_custom_call.1} parent=1 // pred_region
      %32 = dma.done [#allocation6], 256
    $region9: #{tpu_custom_call.1} parent=1 // pred_fallthru
      _
    %v33 = vld [vmem:[#allocation5] sm:$0xff]
    %s34 = scalar_lea.vmem [#allocation5], 8
    %v35 = vld [vmem:[%s34] sm:$0xff]
    %vm36 = vcmp.lt.s32.totalorder %v33, 0
    %v37 = vadd.s32 %v33, 64
    %v38 = vsel %vm36, %v37, %v33
    %vm39 = vcmp.lt.s32.totalorder %v35, 0
    %v40 = vadd.s32 %v35, 64
    %v41 = vsel %vm39, %v40, %v35
    %s42 = sld [smem:[#allocation3]]
    %vm43 = vcmp.eq.s32.totalorder %v38, 0
    %v44 = vstv %s42
    %v45 = vsel %vm43, %v44, 0
    %vm46 = vcmp.eq.s32.totalorder %v41, 0
    %v47 = vsel %vm46, %v44, 0
    %s48 = sld [smem:[#allocation3 + $0x1]]
    %vm49 = vcmp.eq.s32.totalorder %v38, 1
    %v50 = vstv %s48
    %v51 = vsel %vm49, %v50, %v45
    %vm52 = vcmp.eq.s32.totalorder %v41, 1
    %v53 = vsel %vm52, %v50, %v47
    %s54 = sld [smem:[#allocation3 + $0x2]]
    %vm55 = vcmp.eq.s32.totalorder %v38, 2
    %v56 = vstv %s54
    %v57 = vsel %vm55, %v56, %v51
    %vm58 = vcmp.eq.s32.totalorder %v41, 2
    %v59 = vsel %vm58, %v56, %v53
    %s60 = sld [smem:[#allocation3 + $0x3]]
    %vm61 = vcmp.eq.s32.totalorder %v38, 3
    %v62 = vstv %s60
    %v63 = vsel %vm61, %v62, %v57
    %vm64 = vcmp.eq.s32.totalorder %v41, 3
    %v65 = vsel %vm64, %v62, %v59
    %s66 = sld [smem:[#allocation3 + $0x4]]
    %vm67 = vcmp.eq.s32.totalorder %v38, 4
    %v68 = vstv %s66
    %v69 = vsel %vm67, %v68, %v63
    %vm70 = vcmp.eq.s32.totalorder %v41, 4
    %v71 = vsel %vm70, %v68, %v65
    %s72 = sld [smem:[#allocation3 + $0x5]]
    %vm73 = vcmp.eq.s32.totalorder %v38, 5
    %v74 = vstv %s72
    %v75 = vsel %vm73, %v74, %v69
    %vm76 = vcmp.eq.s32.totalorder %v41, 5
    %v77 = vsel %vm76, %v74, %v71
    %s78 = sld [smem:[#allocation3 + $0x6]]
    %vm79 = vcmp.eq.s32.totalorder %v38, 6
    %v80 = vstv %s78
    %v81 = vsel %vm79, %v80, %v75
    %vm82 = vcmp.eq.s32.totalorder %v41, 6
    %v83 = vsel %vm82, %v80, %v77
    %s84 = sld [smem:[#allocation3 + $0x7]]
    %vm85 = vcmp.eq.s32.totalorder %v38, 7
    %v86 = vstv %s84
    %v87 = vsel %vm85, %v86, %v81
    %vm88 = vcmp.eq.s32.totalorder %v41, 7
    %v89 = vsel %vm88, %v86, %v83
    %s90 = sld [smem:[#allocation3 + $0x8]]
    %vm91 = vcmp.eq.s32.totalorder %v38, 8
    %v92 = vstv %s90
    %v93 = vsel %vm91, %v92, %v87
    %vm94 = vcmp.eq.s32.totalorder %v41, 8
    %v95 = vsel %vm94, %v92, %v89
    %s96 = sld [smem:[#allocation3 + $0x9]]
    %vm97 = vcmp.eq.s32.totalorder %v38, 9
    %v98 = vstv %s96
    %v99 = vsel %vm97, %v98, %v93
    %vm100 = vcmp.eq.s32.totalorder %v41, 9
    %v101 = vsel %vm100, %v98, %v95
    %s102 = sld [smem:[#allocation3 + $0xa]]
    %vm103 = vcmp.eq.s32.totalorder %v38, 10
    %v104 = vstv %s102
    %v105 = vsel %vm103, %v104, %v99
    %vm106 = vcmp.eq.s32.totalorder %v41, 10
    %v107 = vsel %vm106, %v104, %v101
    %s108 = sld [smem:[#allocation3 + $0xb]]
    %vm109 = vcmp.eq.s32.totalorder %v38, 11
    %v110 = vstv %s108
    %v111 = vsel %vm109, %v110, %v105
    %vm112 = vcmp.eq.s32.totalorder %v41, 11
    %v113 = vsel %vm112, %v110, %v107
    %s114 = sld [smem:[#allocation3 + $0xc]]
    %vm115 = vcmp.eq.s32.totalorder %v38, 12
    %v116 = vstv %s114
    %v117 = vsel %vm115, %v116, %v111
    %vm118 = vcmp.eq.s32.totalorder %v41, 12
    %v119 = vsel %vm118, %v116, %v113
    %s120 = sld [smem:[#allocation3 + $0xd]]
    %vm121 = vcmp.eq.s32.totalorder %v38, 13
    %v122 = vstv %s120
    %v123 = vsel %vm121, %v122, %v117
    %vm124 = vcmp.eq.s32.totalorder %v41, 13
    %v125 = vsel %vm124, %v122, %v119
    %s126 = sld [smem:[#allocation3 + $0xe]]
    %vm127 = vcmp.eq.s32.totalorder %v38, 14
    %v128 = vstv %s126
    %v129 = vsel %vm127, %v128, %v123
    %vm130 = vcmp.eq.s32.totalorder %v41, 14
    %v131 = vsel %vm130, %v128, %v125
    %s132 = sld [smem:[#allocation3 + $0xf]]
    %vm133 = vcmp.eq.s32.totalorder %v38, 15
    %v134 = vstv %s132
    %v135 = vsel %vm133, %v134, %v129
    %vm136 = vcmp.eq.s32.totalorder %v41, 15
    %v137 = vsel %vm136, %v134, %v131
    %s138 = sld [smem:[#allocation3 + $0x10]]
    %vm139 = vcmp.eq.s32.totalorder %v38, 16
    %v140 = vstv %s138
    %v141 = vsel %vm139, %v140, %v135
    %vm142 = vcmp.eq.s32.totalorder %v41, 16
    %v143 = vsel %vm142, %v140, %v137
    %s144 = sld [smem:[#allocation3 + $0x11]]
    %vm145 = vcmp.eq.s32.totalorder %v38, 17
    %v146 = vstv %s144
    %v147 = vsel %vm145, %v146, %v141
    %vm148 = vcmp.eq.s32.totalorder %v41, 17
    %v149 = vsel %vm148, %v146, %v143
    %s150 = sld [smem:[#allocation3 + $0x12]]
    %vm151 = vcmp.eq.s32.totalorder %v38, 18
    %v152 = vstv %s150
    %v153 = vsel %vm151, %v152, %v147
    %vm154 = vcmp.eq.s32.totalorder %v41, 18
    %v155 = vsel %vm154, %v152, %v149
    %s156 = sld [smem:[#allocation3 + $0x13]]
    %vm157 = vcmp.eq.s32.totalorder %v38, 19
    %v158 = vstv %s156
    %v159 = vsel %vm157, %v158, %v153
    %vm160 = vcmp.eq.s32.totalorder %v41, 19
    %v161 = vsel %vm160, %v158, %v155
    %s162 = sld [smem:[#allocation3 + $0x14]]
    %vm163 = vcmp.eq.s32.totalorder %v38, 20
    %v164 = vstv %s162
    %v165 = vsel %vm163, %v164, %v159
    %vm166 = vcmp.eq.s32.totalorder %v41, 20
    %v167 = vsel %vm166, %v164, %v161
    %s168 = sld [smem:[#allocation3 + $0x15]]
    %vm169 = vcmp.eq.s32.totalorder %v38, 21
    %v170 = vstv %s168
    %v171 = vsel %vm169, %v170, %v165
    %vm172 = vcmp.eq.s32.totalorder %v41, 21
    %v173 = vsel %vm172, %v170, %v167
    %s174 = sld [smem:[#allocation3 + $0x16]]
    %vm175 = vcmp.eq.s32.totalorder %v38, 22
    %v176 = vstv %s174
    %v177 = vsel %vm175, %v176, %v171
    %vm178 = vcmp.eq.s32.totalorder %v41, 22
    %v179 = vsel %vm178, %v176, %v173
    %s180 = sld [smem:[#allocation3 + $0x17]]
    %vm181 = vcmp.eq.s32.totalorder %v38, 23
    %v182 = vstv %s180
    %v183 = vsel %vm181, %v182, %v177
    %vm184 = vcmp.eq.s32.totalorder %v41, 23
    %v185 = vsel %vm184, %v182, %v179
    %s186 = sld [smem:[#allocation3 + $0x18]]
    %vm187 = vcmp.eq.s32.totalorder %v38, 24
    %v188 = vstv %s186
    %v189 = vsel %vm187, %v188, %v183
    %vm190 = vcmp.eq.s32.totalorder %v41, 24
    %v191 = vsel %vm190, %v188, %v185
    %s192 = sld [smem:[#allocation3 + $0x19]]
    %vm193 = vcmp.eq.s32.totalorder %v38, 25
    %v194 = vstv %s192
    %v195 = vsel %vm193, %v194, %v189
    %vm196 = vcmp.eq.s32.totalorder %v41, 25
    %v197 = vsel %vm196, %v194, %v191
    %s198 = sld [smem:[#allocation3 + $0x1a]]
    %vm199 = vcmp.eq.s32.totalorder %v38, 26
    %v200 = vstv %s198
    %v201 = vsel %vm199, %v200, %v195
    %vm202 = vcmp.eq.s32.totalorder %v41, 26
    %v203 = vsel %vm202, %v200, %v197
    %s204 = sld [smem:[#allocation3 + $0x1b]]
    %vm205 = vcmp.eq.s32.totalorder %v38, 27
    %v206 = vstv %s204
    %v207 = vsel %vm205, %v206, %v201
    %vm208 = vcmp.eq.s32.totalorder %v41, 27
    %v209 = vsel %vm208, %v206, %v203
    %s210 = sld [smem:[#allocation3 + $0x1c]]
    %vm211 = vcmp.eq.s32.totalorder %v38, 28
    %v212 = vstv %s210
    %v213 = vsel %vm211, %v212, %v207
    %vm214 = vcmp.eq.s32.totalorder %v41, 28
    %v215 = vsel %vm214, %v212, %v209
    %s216 = sld [smem:[#allocation3 + $0x1d]]
    %vm217 = vcmp.eq.s32.totalorder %v38, 29
    %v218 = vstv %s216
    %v219 = vsel %vm217, %v218, %v213
    %vm220 = vcmp.eq.s32.totalorder %v41, 29
    %v221 = vsel %vm220, %v218, %v215
    %s222 = sld [smem:[#allocation3 + $0x1e]]
    %vm223 = vcmp.eq.s32.totalorder %v38, 30
    %v224 = vstv %s222
    %v225 = vsel %vm223, %v224, %v219
    %vm226 = vcmp.eq.s32.totalorder %v41, 30
    %v227 = vsel %vm226, %v224, %v221
    %s228 = sld [smem:[#allocation3 + $0x1f]]
    %vm229 = vcmp.eq.s32.totalorder %v38, 31
    %v230 = vstv %s228
    %v231 = vsel %vm229, %v230, %v225
    %vm232 = vcmp.eq.s32.totalorder %v41, 31
    %v233 = vsel %vm232, %v230, %v227
    %s234 = sld [smem:[#allocation3 + $0x20]]
    %vm235 = vcmp.eq.s32.totalorder %v38, 32
    %v236 = vstv %s234
    %v237 = vsel %vm235, %v236, %v231
    %vm238 = vcmp.eq.s32.totalorder %v41, 32
    %v239 = vsel %vm238, %v236, %v233
    %s240 = sld [smem:[#allocation3 + $0x21]]
    %vm241 = vcmp.eq.s32.totalorder %v38, 33
    %v242 = vstv %s240
    %v243 = vsel %vm241, %v242, %v237
    %vm244 = vcmp.eq.s32.totalorder %v41, 33
    %v245 = vsel %vm244, %v242, %v239
    %s246 = sld [smem:[#allocation3 + $0x22]]
    %vm247 = vcmp.eq.s32.totalorder %v38, 34
    %v248 = vstv %s246
    %v249 = vsel %vm247, %v248, %v243
    %vm250 = vcmp.eq.s32.totalorder %v41, 34
    %v251 = vsel %vm250, %v248, %v245
    %s252 = sld [smem:[#allocation3 + $0x23]]
    %vm253 = vcmp.eq.s32.totalorder %v38, 35
    %v254 = vstv %s252
    %v255 = vsel %vm253, %v254, %v249
    %vm256 = vcmp.eq.s32.totalorder %v41, 35
    %v257 = vsel %vm256, %v254, %v251
    %s258 = sld [smem:[#allocation3 + $0x24]]
    %vm259 = vcmp.eq.s32.totalorder %v38, 36
    %v260 = vstv %s258
    %v261 = vsel %vm259, %v260, %v255
    %vm262 = vcmp.eq.s32.totalorder %v41, 36
    %v263 = vsel %vm262, %v260, %v257
    %s264 = sld [smem:[#allocation3 + $0x25]]
    %vm265 = vcmp.eq.s32.totalorder %v38, 37
    %v266 = vstv %s264
    %v267 = vsel %vm265, %v266, %v261
    %vm268 = vcmp.eq.s32.totalorder %v41, 37
    %v269 = vsel %vm268, %v266, %v263
    %s270 = sld [smem:[#allocation3 + $0x26]]
    %vm271 = vcmp.eq.s32.totalorder %v38, 38
    %v272 = vstv %s270
    %v273 = vsel %vm271, %v272, %v267
    %vm274 = vcmp.eq.s32.totalorder %v41, 38
    %v275 = vsel %vm274, %v272, %v269
    %s276 = sld [smem:[#allocation3 + $0x27]]
    %vm277 = vcmp.eq.s32.totalorder %v38, 39
    %v278 = vstv %s276
    %v279 = vsel %vm277, %v278, %v273
    %vm280 = vcmp.eq.s32.totalorder %v41, 39
    %v281 = vsel %vm280, %v278, %v275
    %s282 = sld [smem:[#allocation3 + $0x28]]
    %vm283 = vcmp.eq.s32.totalorder %v38, 40
    %v284 = vstv %s282
    %v285 = vsel %vm283, %v284, %v279
    %vm286 = vcmp.eq.s32.totalorder %v41, 40
    %v287 = vsel %vm286, %v284, %v281
    %s288 = sld [smem:[#allocation3 + $0x29]]
    %vm289 = vcmp.eq.s32.totalorder %v38, 41
    %v290 = vstv %s288
    %v291 = vsel %vm289, %v290, %v285
    %vm292 = vcmp.eq.s32.totalorder %v41, 41
    %v293 = vsel %vm292, %v290, %v287
    %s294 = sld [smem:[#allocation3 + $0x2a]]
    %vm295 = vcmp.eq.s32.totalorder %v38, 42
    %v296 = vstv %s294
    %v297 = vsel %vm295, %v296, %v291
    %vm298 = vcmp.eq.s32.totalorder %v41, 42
    %v299 = vsel %vm298, %v296, %v293
    %s300 = sld [smem:[#allocation3 + $0x2b]]
    %vm301 = vcmp.eq.s32.totalorder %v38, 43
    %v302 = vstv %s300
    %v303 = vsel %vm301, %v302, %v297
    %vm304 = vcmp.eq.s32.totalorder %v41, 43
    %v305 = vsel %vm304, %v302, %v299
    %s306 = sld [smem:[#allocation3 + $0x2c]]
    %vm307 = vcmp.eq.s32.totalorder %v38, 44
    %v308 = vstv %s306
    %v309 = vsel %vm307, %v308, %v303
    %vm310 = vcmp.eq.s32.totalorder %v41, 44
    %v311 = vsel %vm310, %v308, %v305
    %s312 = sld [smem:[#allocation3 + $0x2d]]
    %vm313 = vcmp.eq.s32.totalorder %v38, 45
    %v314 = vstv %s312
    %v315 = vsel %vm313, %v314, %v309
    %vm316 = vcmp.eq.s32.totalorder %v41, 45
    %v317 = vsel %vm316, %v314, %v311
    %s318 = sld [smem:[#allocation3 + $0x2e]]
    %vm319 = vcmp.eq.s32.totalorder %v38, 46
    %v320 = vstv %s318
    %v321 = vsel %vm319, %v320, %v315
    %vm322 = vcmp.eq.s32.totalorder %v41, 46
    %v323 = vsel %vm322, %v320, %v317
    %s324 = sld [smem:[#allocation3 + $0x2f]]
    %vm325 = vcmp.eq.s32.totalorder %v38, 47
    %v326 = vstv %s324
    %v327 = vsel %vm325, %v326, %v321
    %vm328 = vcmp.eq.s32.totalorder %v41, 47
    %v329 = vsel %vm328, %v326, %v323
    %s330 = sld [smem:[#allocation3 + $0x30]]
    %vm331 = vcmp.eq.s32.totalorder %v38, 48
    %v332 = vstv %s330
    %v333 = vsel %vm331, %v332, %v327
    %vm334 = vcmp.eq.s32.totalorder %v41, 48
    %v335 = vsel %vm334, %v332, %v329
    %s336 = sld [smem:[#allocation3 + $0x31]]
    %vm337 = vcmp.eq.s32.totalorder %v38, 49
    %v338 = vstv %s336
    %v339 = vsel %vm337, %v338, %v333
    %vm340 = vcmp.eq.s32.totalorder %v41, 49
    %v341 = vsel %vm340, %v338, %v335
    %s342 = sld [smem:[#allocation3 + $0x32]]
    %vm343 = vcmp.eq.s32.totalorder %v38, 50
    %v344 = vstv %s342
    %v345 = vsel %vm343, %v344, %v339
    %vm346 = vcmp.eq.s32.totalorder %v41, 50
    %v347 = vsel %vm346, %v344, %v341
    %s348 = sld [smem:[#allocation3 + $0x33]]
    %vm349 = vcmp.eq.s32.totalorder %v38, 51
    %v350 = vstv %s348
    %v351 = vsel %vm349, %v350, %v345
    %vm352 = vcmp.eq.s32.totalorder %v41, 51
    %v353 = vsel %vm352, %v350, %v347
    %s354 = sld [smem:[#allocation3 + $0x34]]
    %vm355 = vcmp.eq.s32.totalorder %v38, 52
    %v356 = vstv %s354
    %v357 = vsel %vm355, %v356, %v351
    %vm358 = vcmp.eq.s32.totalorder %v41, 52
    %v359 = vsel %vm358, %v356, %v353
    %s360 = sld [smem:[#allocation3 + $0x35]]
    %vm361 = vcmp.eq.s32.totalorder %v38, 53
    %v362 = vstv %s360
    %v363 = vsel %vm361, %v362, %v357
    %vm364 = vcmp.eq.s32.totalorder %v41, 53
    %v365 = vsel %vm364, %v362, %v359
    %s366 = sld [smem:[#allocation3 + $0x36]]
    %vm367 = vcmp.eq.s32.totalorder %v38, 54
    %v368 = vstv %s366
    %v369 = vsel %vm367, %v368, %v363
    %vm370 = vcmp.eq.s32.totalorder %v41, 54
    %v371 = vsel %vm370, %v368, %v365
    %s372 = sld [smem:[#allocation3 + $0x37]]
    %vm373 = vcmp.eq.s32.totalorder %v38, 55
    %v374 = vstv %s372
    %v375 = vsel %vm373, %v374, %v369
    %vm376 = vcmp.eq.s32.totalorder %v41, 55
    %v377 = vsel %vm376, %v374, %v371
    %s378 = sld [smem:[#allocation3 + $0x38]]
    %vm379 = vcmp.eq.s32.totalorder %v38, 56
    %v380 = vstv %s378
    %v381 = vsel %vm379, %v380, %v375
    %vm382 = vcmp.eq.s32.totalorder %v41, 56
    %v383 = vsel %vm382, %v380, %v377
    %s384 = sld [smem:[#allocation3 + $0x39]]
    %vm385 = vcmp.eq.s32.totalorder %v38, 57
    %v386 = vstv %s384
    %v387 = vsel %vm385, %v386, %v381
    %vm388 = vcmp.eq.s32.totalorder %v41, 57
    %v389 = vsel %vm388, %v386, %v383
    %s390 = sld [smem:[#allocation3 + $0x3a]]
    %vm391 = vcmp.eq.s32.totalorder %v38, 58
    %v392 = vstv %s390
    %v393 = vsel %vm391, %v392, %v387
    %vm394 = vcmp.eq.s32.totalorder %v41, 58
    %v395 = vsel %vm394, %v392, %v389
    %s396 = sld [smem:[#allocation3 + $0x3b]]
    %vm397 = vcmp.eq.s32.totalorder %v38, 59
    %v398 = vstv %s396
    %v399 = vsel %vm397, %v398, %v393
    %vm400 = vcmp.eq.s32.totalorder %v41, 59
    %v401 = vsel %vm400, %v398, %v395
    %s402 = sld [smem:[#allocation3 + $0x3c]]
    %vm403 = vcmp.eq.s32.totalorder %v38, 60
    %v404 = vstv %s402
    %v405 = vsel %vm403, %v404, %v399
    %vm406 = vcmp.eq.s32.totalorder %v41, 60
    %v407 = vsel %vm406, %v404, %v401
    %s408 = sld [smem:[#allocation3 + $0x3d]]
    %vm409 = vcmp.eq.s32.totalorder %v38, 61
    %v410 = vstv %s408
    %v411 = vsel %vm409, %v410, %v405
    %vm412 = vcmp.eq.s32.totalorder %v41, 61
    %v413 = vsel %vm412, %v410, %v407
    %s414 = sld [smem:[#allocation3 + $0x3e]]
    %vm415 = vcmp.eq.s32.totalorder %v38, 62
    %v416 = vstv %s414
    %v417 = vsel %vm415, %v416, %v411
    %vm418 = vcmp.eq.s32.totalorder %v41, 62
    %v419 = vsel %vm418, %v416, %v413
    %s420 = sld [smem:[#allocation3 + $0x3f]]
    %vm421 = vcmp.eq.s32.totalorder %v38, 63
    %v422 = vstv %s420
    %v423 = vsel %vm421, %v422, %v417
    %vm424 = vcmp.eq.s32.totalorder %v41, 63
    %v425 = vsel %vm424, %v422, %v419
    %v426 = vand.u32 %v423, 65535
    %v427 = vand.u32 %v425, 65535
    %v428 = vshra.s32 %v423, 16
    %v429 = vshra.s32 %v425, 16
    %vm430 = vcmp.eq.s32.totalorder %v426, %v427
    %vm431 = vcmp.eq.s32.totalorder %v426, %v429
    %vm432 = vmor %vm430, %vm431
    %vm433 = vcmp.eq.s32.totalorder %v427, %v428
    %vm434 = vmor %vm432, %vm433
    %vm435 = vcmp.ge.s32.totalorder %v33, 0
    %vm436 = vmand %vm434, %vm435
    %vm437 = vcmp.lt.s32.totalorder %v426, %v427
    %v438 = vsel %vm437, %v426, %v427
    %vm439 = vcmp.gt.s32.totalorder %v426, %v427
    %v440 = vsel %vm439, %v426, %v427
    %v441 = vshll.u32 %v440, 16
    %v442 = vor.u32 %v438, %v441
    %s443 = sld [smem:[#allocation4]]
    %v444 = vstv %s443
    %vm445 = vcmp.eq.s32.totalorder %v442, %v444
    %vm446 = vmor %vm436, %vm445
    %s447 = sld [smem:[#allocation4 + $0x1]]
    %v448 = vstv %s447
    %vm449 = vcmp.eq.s32.totalorder %v442, %v448
    %vm450 = vmor %vm446, %vm449
    %s451 = sld [smem:[#allocation4 + $0x2]]
    %v452 = vstv %s451
    %vm453 = vcmp.eq.s32.totalorder %v442, %v452
    %vm454 = vmor %vm450, %vm453
    %s455 = sld [smem:[#allocation4 + $0x3]]
    %v456 = vstv %s455
    %vm457 = vcmp.eq.s32.totalorder %v442, %v456
    %vm458 = vmor %vm454, %vm457
    %s459 = sld [smem:[#allocation4 + $0x4]]
    %v460 = vstv %s459
    %vm461 = vcmp.eq.s32.totalorder %v442, %v460
    %vm462 = vmor %vm458, %vm461
    %s463 = sld [smem:[#allocation4 + $0x5]]
    %v464 = vstv %s463
    %vm465 = vcmp.eq.s32.totalorder %v442, %v464
    %vm466 = vmor %vm462, %vm465
    %s467 = sld [smem:[#allocation4 + $0x6]]
    %v468 = vstv %s467
    %vm469 = vcmp.eq.s32.totalorder %v442, %v468
    %vm470 = vmor %vm466, %vm469
    %s471 = sld [smem:[#allocation4 + $0x7]]
    %v472 = vstv %s471
    %vm473 = vcmp.eq.s32.totalorder %v442, %v472
    %vm474 = vmor %vm470, %vm473
    %v475 = vsel %vm474, 4294967295, %v33
    %476 = vst [vmem:[#allocation8] sm:$0xff] %v475
    %v477 = vld [vmem:[%s34] sm:$0xff]
    %v478 = vsel %vm474, 4294967295, %v477
    %s479 = scalar_lea.vmem [#allocation8], 8
    %480 = vst [vmem:[%s479] sm:$0xff] %v478
    // Predicated region
    $region10: #{tpu_custom_call.1} parent=1 // pred_check
      _
    $region11: #{tpu_custom_call.1} parent=1 // pred_check_branch
      %482 = sbr.rel (0) target = $region13
    $region12: #{tpu_custom_call.1} parent=1 // pred_region
      %s484 = ssub.s32 256, 256
      %485 = vsyncadd [#allocation7], %s484
      %s486 = sshll.u32 [#allocation8], 4
      %s487 = int_to_ptr.vmem [resolvable:$true] %s486
      %492 = dma.vmem_to_hbm [thread:$0]  %s487, 256, %s3, [#allocation7], 128, 128, 8
    $region13: #{tpu_custom_call.1} parent=1 // pred_fallthru
      _
    // Predicated region
    $region14: #{tpu_custom_call.1} parent=1 // pred_check
      _
    $region15: #{tpu_custom_call.1} parent=1 // pred_check_branch
      %494 = sbr.rel (0) target = $region17
    $region16: #{tpu_custom_call.1} parent=1 // pred_region
      %495 = dma.done [#allocation7], 256
    $region17: #{tpu_custom_call.1} parent=1 // pred_fallthru
      _
    %496 = vsyncpa [#allocation6], 1
    %497 = vsyncpa [#allocation7], 1

</llo_original>
